<compile_context>
chip_gen: v7x
topology: tpu7x:2x2x1
jax: 0.10.0
libtpu: 0.0.40
codegen_flags: <defaults>
</compile_context>

<pallas_src>
import math
import jax
import jax.numpy as jnp
from jax.experimental import pallas as pl
from jax.experimental.pallas import tpu as pltpu


# ----------------------------- Pallas kernel --------------------------------

def mlp_kernel(x1_ref,
               w1_ref, b1_ref,
               w2_ref, b2_ref,
               w3_ref, b3_ref,
               out_ref):
    def leaky_relu(v):
        return jnp.where(v > 0, v, 0.01 * v)   # F.leaky_relu default slope

    # Layer 1: heur_fc1 + heur_batch (BN folded into W1/b1) + leaky_relu.
    # x1 arrives K-padded to 128 lanes (zeros contribute exactly 0 to the dot).
    x = x1_ref[...].astype(jnp.bfloat16)                       # (TB, 128)
    h = jnp.dot(x, w1_ref[...], preferred_element_type=jnp.float32)
    h = leaky_relu(h + b1_ref[...])                            # (TB, 256) f32

    # Layer 2: fc1 + batch3 (BN folded into W2/b2) + leaky_relu.
    h = jnp.dot(h.astype(jnp.bfloat16), w2_ref[...],
                preferred_element_type=jnp.float32)
    h = leaky_relu(h + b2_ref[...])                            # (TB, 1024) f32

    # dropout2: identity at inference time.
    # TODO(synk): training-mode dropout / batch-statistics BN not reproduced
    # (PyTorch RNG not matchable); eval-mode semantics implemented instead.

    # Layer 3: fc2, lane-dense (output N padded 12 -> 128; wrapper slices :12).
    out_ref[...] = (jnp.dot(h.astype(jnp.bfloat16), w3_ref[...],
                            preferred_element_type=jnp.float32)
                    + b3_ref[...]).astype(out_ref.dtype)


# ------------------------------ parameters ----------------------------------

def xavier_uniform(key, out_f, in_f):
    bound = math.sqrt(6.0 / (in_f + out_f))
    # PyTorch weight shape is (out, in); we return it transposed (in, out).
    w = jax.random.uniform(key, (out_f, in_f), jnp.float32, -bound, bound)
    return w.T


def linear_bias(key, out_f, in_f):
    bound = 1.0 / math.sqrt(in_f)
    return jax.random.uniform(key, (out_f,), jnp.float32, -bound, bound)


def make_params(seed=0):
    k = jax.random.split(jax.random.PRNGKey(seed), 6)
    params = {}
    # heur_fc1: Linear(12, 256), xavier_uniform weight, default bias init
    params["w1"] = xavier_uniform(k[0], 256, 12)             # (12, 256)
    params["b1"] = linear_bias(k[1], 256, 12)                 # (256,)
    # fc1: Linear(256, 1024)
    params["w2"] = xavier_uniform(k[2], 1024, 256)            # (256, 1024)
    params["b2"] = linear_bias(k[3], 1024, 256)               # (1024,)
    # fc2: Linear(1024, 12)
    params["w3"] = xavier_uniform(k[4], 12, 1024)             # (1024, 12)
    params["b3"] = linear_bias(k[5], 12, 1024)                # (12,)

    eps = 1e-5
    # BatchNorm1d freshly-initialized running stats: mean=0, var=1, gamma=1, beta=0
    for name, feat in (("bn1", 256), ("bn2", 1024)):
        gamma = jnp.ones((feat,), jnp.float32)
        beta = jnp.zeros((feat,), jnp.float32)
        rmean = jnp.zeros((feat,), jnp.float32)
        rvar = jnp.ones((feat,), jnp.float32)
        scale = gamma / jnp.sqrt(rvar + eps)
        offset = beta - rmean * scale
        params[f"{name}_scale"] = scale
        params[f"{name}_offset"] = offset
    return params


def prepare_kernel_params(params):
    """One-time host-side folding / padding / casting of the kernel operands."""
    f32, bf16 = jnp.float32, jnp.bfloat16
    # Fold eval-mode BN into the preceding linear:
    #   (x @ W + b) * s + o  ==  x @ (W * s) + (b * s + o)
    w1f = params["w1"] * params["bn1_scale"][None, :]                  # (12, 256)
    b1f = params["b1"] * params["bn1_scale"] + params["bn1_offset"]    # (256,)
    w2f = params["w2"] * params["bn2_scale"][None, :]                  # (256, 1024)
    b2f = params["b2"] * params["bn2_scale"] + params["bn2_offset"]    # (1024,)

    # K-pad W1: 12 -> 128 (zeros contribute exactly 0 to the matmul).
    w1p = jnp.zeros((128, 256), f32).at[:12, :].set(w1f)
    # N-pad W3/b3: 12 -> 128 for lane-dense output stores.
    w3p = jnp.zeros((1024, 128), f32).at[:, :12].set(params["w3"])
    b3p = jnp.zeros((128,), f32).at[:12].set(params["b3"])

    return {
        "w1": w1p.astype(bf16),                     # (128, 256)  bf16, K-padded, BN-folded
        "b1": b1f.reshape(1, 256).astype(f32),
        "w2": w2f.astype(bf16),                     # (256, 1024) bf16, BN-folded
        "b2": b2f.reshape(1, 1024).astype(f32),
        "w3": w3p.astype(bf16),                     # (1024, 128) bf16, N-padded
        "b3": b3p.reshape(1, 128).astype(f32),
    }


# ------------------------------- wrapper -------------------------------------

def _round_up(n, m):
    return ((n + m - 1) // m) * m


def net_without_row_forward(x, x1, kp, *, max_tb=1024):
    del x  # unused by the PyTorch module's forward
    B = x1.shape[0]

    # Batch tile: multiple of 8 (sublane), capped at max_tb (keeps the live set
    # well under v7x's 64 MiB VMEM), and clamped so the grid has >= 2 steps when
    # B is large enough that "parallel" can shard across both v7x TensorCores.
    TB = min(max_tb, max(8, _round_up(pl.cdiv(B, 2), 8)))
    grid = (pl.cdiv(B, TB),)

    # Pad x1 to 128 lanes once on the host side: lane-dense input DMA and no
    # in-kernel pad / scratch round trip.
    x1p = jnp.pad(x1.astype(jnp.float32), ((0, 0), (0, 128 - x1.shape[1])))

    const = lambda i: (0, 0)   # weights/biases: same block every step -> VMEM-resident

    out = pl.pallas_call(
        mlp_kernel,
        out_shape=jax.ShapeDtypeStruct((B, 128), jnp.float32),
        grid=grid,
        in_specs=[
            pl.BlockSpec((TB, 128), lambda i: (i, 0)),    # x1 (K-padded, f32)
            pl.BlockSpec((128, 256), const),              # w1 (bf16, K-padded, BN-folded)
            pl.BlockSpec((1, 256), const),                # b1 (f32)
            pl.BlockSpec((256, 1024), const),             # w2 (bf16, BN-folded)
            pl.BlockSpec((1, 1024), const),               # b2 (f32)
            pl.BlockSpec((1024, 128), const),             # w3 (bf16, N-padded)
            pl.BlockSpec((1, 128), const),                # b3 (f32, N-padded)
        ],
        out_specs=pl.BlockSpec((TB, 128), lambda i: (i, 0)),
        compiler_params=pltpu.CompilerParams(
            dimension_semantics=("parallel",),
            vmem_limit_bytes=48 * 1024 * 1024,
        ),
    )(x1p, kp["w1"], kp["b1"], kp["w2"], kp["b2"], kp["w3"], kp["b3"])

    return out[:, :12]


# ----------------------------- reference & main -------------------------------

def reference_forward(x, x1, params):
    """Pure-f32 eval-mode reference of the PyTorch module."""
    del x
    hi = jax.lax.Precision.HIGHEST

    def lrelu(v):
        return jnp.where(v > 0, v, 0.01 * v)

    h = jnp.dot(x1.astype(jnp.float32), params["w1"], precision=hi) + params["b1"]
    h = h * params["bn1_scale"] + params["bn1_offset"]
    h = lrelu(h)
    h = jnp.dot(h, params["w2"], precision=hi) + params["b2"]
    h = h * params["bn2_scale"] + params["bn2_offset"]
    h = lrelu(h)
    return jnp.dot(h, params["w3"], precision=hi) + params["b3"]


if __name__ == "__main__":
    key = jax.random.PRNGKey(0)
    kx, kx1 = jax.random.split(key)

    B = 8
    x = jax.random.normal(kx, (B, 12), jnp.float32)    # unused by forward
    x1 = jax.random.normal(kx1, (B, 12), jnp.float32)

    params = make_params(seed=0)
    kparams = prepare_kernel_params(params)

    out = net_without_row_forward(x, x1, kparams)
    out = jax.block_until_ready(out)

    ref = reference_forward(x, x1, params)
    assert out.shape == (B, 12)
    # Tolerance accommodates bf16 weights/activations on the MXU (not
    # bit-matched to the f32 reference).
    assert jnp.allclose(out, ref, atol=2e-2, rtol=2e-2)

    print("KERNEL_OK")
</pallas_src>

<mosaic_0001>
module attributes {stable_mosaic.version = 11 : i64} {
  func.func @mlp_kernel(%arg0: i32, %arg1: memref<8x128xf32, #tpu.memory_space<vmem>>, %arg2: memref<128x256xbf16, #tpu.memory_space<vmem>>, %arg3: memref<1x256xf32, #tpu.memory_space<vmem>>, %arg4: memref<256x1024xbf16, #tpu.memory_space<vmem>>, %arg5: memref<1x1024xf32, #tpu.memory_space<vmem>>, %arg6: memref<1024x128xbf16, #tpu.memory_space<vmem>>, %arg7: memref<1x128xf32, #tpu.memory_space<vmem>>, %arg8: memref<8x128xf32, #tpu.memory_space<vmem>>) attributes {dimension_semantics = [#tpu.dimension_semantics<parallel>], iteration_bounds = array<i64: 1>, scalar_prefetch = 0 : i64, scratch_operands = 0 : i64, tpu.core_type = #tpu.core_type<tc>, window_params = [{transform_indices = @transform_0, window_bounds = array<i64: 8, 128>}, {pipeline_mode = #tpu.pipeline_mode<synchronous>, transform_indices = @transform_1, window_bounds = array<i64: 128, 256>}, {pipeline_mode = #tpu.pipeline_mode<synchronous>, transform_indices = @transform_2, window_bounds = array<i64: 1, 256>}, {pipeline_mode = #tpu.pipeline_mode<synchronous>, transform_indices = @transform_3, window_bounds = array<i64: 256, 1024>}, {pipeline_mode = #tpu.pipeline_mode<synchronous>, transform_indices = @transform_4, window_bounds = array<i64: 1, 1024>}, {pipeline_mode = #tpu.pipeline_mode<synchronous>, transform_indices = @transform_5, window_bounds = array<i64: 1024, 128>}, {pipeline_mode = #tpu.pipeline_mode<synchronous>, transform_indices = @transform_6, window_bounds = array<i64: 1, 128>}, {transform_indices = @transform_7, window_bounds = array<i64: 8, 128>}]} {
    %c0 = arith.constant 0 : index
    %c0_0 = arith.constant 0 : index
    %0 = vector.load %arg1[%c0, %c0_0] : memref<8x128xf32, #tpu.memory_space<vmem>>, vector<8x128xf32>
    %1 = arith.truncf %0 : vector<8x128xf32> to vector<8x128xbf16>
    %c0_1 = arith.constant 0 : index
    %c0_2 = arith.constant 0 : index
    %2 = vector.load %arg2[%c0_1, %c0_2] : memref<128x256xbf16, #tpu.memory_space<vmem>>, vector<128x256xbf16>
    %cst = arith.constant dense<0.000000e+00> : vector<8x256xf32>
    %3 = tpu.matmul %1, %2, %cst {dimension_numbers = #tpu.dot_dimension_numbers<[1], [0], [0], [1], [0, 0, 1, 1], [], []>} : vector<8x128xbf16>, vector<128x256xbf16>, vector<8x256xf32> -> vector<8x256xf32>
    %c0_3 = arith.constant 0 : index
    %c0_4 = arith.constant 0 : index
    %4 = vector.load %arg3[%c0_3, %c0_4] : memref<1x256xf32, #tpu.memory_space<vmem>>, vector<1x256xf32>
    %5 = vector.broadcast %4 : vector<1x256xf32> to vector<8x256xf32>
    %6 = arith.addf %3, %5 : vector<8x256xf32>
    %cst_5 = arith.constant 0.000000e+00 : f32
    %7 = vector.broadcast %cst_5 : f32 to vector<8x256xf32>
    %8 = arith.cmpf ogt, %6, %7 : vector<8x256xf32>
    %cst_6 = arith.constant 0.00999999977 : f32
    %9 = vector.broadcast %cst_6 : f32 to vector<8x256xf32>
    %10 = arith.mulf %9, %6 : vector<8x256xf32>
    %11 = arith.select %8, %6, %10 : vector<8x256xi1>, vector<8x256xf32>
    %12 = arith.truncf %11 : vector<8x256xf32> to vector<8x256xbf16>
    %c0_7 = arith.constant 0 : index
    %c0_8 = arith.constant 0 : index
    %13 = vector.load %arg4[%c0_7, %c0_8] : memref<256x1024xbf16, #tpu.memory_space<vmem>>, vector<256x1024xbf16>
    %cst_9 = arith.constant dense<0.000000e+00> : vector<8x1024xf32>
    %14 = tpu.matmul %12, %13, %cst_9 {dimension_numbers = #tpu.dot_dimension_numbers<[1], [0], [0], [1], [0, 0, 1, 1], [], []>} : vector<8x256xbf16>, vector<256x1024xbf16>, vector<8x1024xf32> -> vector<8x1024xf32>
    %c0_10 = arith.constant 0 : index
    %c0_11 = arith.constant 0 : index
    %15 = vector.load %arg5[%c0_10, %c0_11] : memref<1x1024xf32, #tpu.memory_space<vmem>>, vector<1x1024xf32>
    %16 = vector.broadcast %15 : vector<1x1024xf32> to vector<8x1024xf32>
    %17 = arith.addf %14, %16 : vector<8x1024xf32>
    %cst_12 = arith.constant 0.000000e+00 : f32
    %18 = vector.broadcast %cst_12 : f32 to vector<8x1024xf32>
    %19 = arith.cmpf ogt, %17, %18 : vector<8x1024xf32>
    %cst_13 = arith.constant 0.00999999977 : f32
    %20 = vector.broadcast %cst_13 : f32 to vector<8x1024xf32>
    %21 = arith.mulf %20, %17 : vector<8x1024xf32>
    %22 = arith.select %19, %17, %21 : vector<8x1024xi1>, vector<8x1024xf32>
    %23 = arith.truncf %22 : vector<8x1024xf32> to vector<8x1024xbf16>
    %c0_14 = arith.constant 0 : index
    %c0_15 = arith.constant 0 : index
    %24 = vector.load %arg6[%c0_14, %c0_15] : memref<1024x128xbf16, #tpu.memory_space<vmem>>, vector<1024x128xbf16>
    %cst_16 = arith.constant dense<0.000000e+00> : vector<8x128xf32>
    %25 = tpu.matmul %23, %24, %cst_16 {dimension_numbers = #tpu.dot_dimension_numbers<[1], [0], [0], [1], [0, 0, 1, 1], [], []>} : vector<8x1024xbf16>, vector<1024x128xbf16>, vector<8x128xf32> -> vector<8x128xf32>
    %c0_17 = arith.constant 0 : index
    %c0_18 = arith.constant 0 : index
    %26 = vector.load %arg7[%c0_17, %c0_18] : memref<1x128xf32, #tpu.memory_space<vmem>>, vector<1x128xf32>
    %27 = vector.broadcast %26 : vector<1x128xf32> to vector<8x128xf32>
    %28 = arith.addf %25, %27 : vector<8x128xf32>
    %c0_19 = arith.constant 0 : index
    %c0_20 = arith.constant 0 : index
    %29 = vector.load %arg8[%c0_19, %c0_20] : memref<8x128xf32, #tpu.memory_space<vmem>>, vector<8x128xf32>
    tpu.vector_store %arg8[%c0_19, %c0_20], %28 {strides = array<i32>} : memref<8x128xf32, #tpu.memory_space<vmem>>, vector<8x128xf32>,
    return
  }
  func.func @transform_0(%arg0: i32) -> (i32, i32) {
    %c0_i32 = arith.constant 0 : i32
    %c0_i32_0 = arith.constant 0 : i32
    return %arg0, %c0_i32 : i32, i32
  }
  func.func @transform_1(%arg0: i32) -> (i32, i32) {
    %c0_i32 = arith.constant 0 : i32
    %c0_i32_0 = arith.constant 0 : i32
    %c0_i32_1 = arith.constant 0 : i32
    return %c0_i32, %c0_i32_0 : i32, i32
  }
  func.func @transform_2(%arg0: i32) -> (i32, i32) {
    %c0_i32 = arith.constant 0 : i32
    %c0_i32_0 = arith.constant 0 : i32
    %c0_i32_1 = arith.constant 0 : i32
    return %c0_i32, %c0_i32_0 : i32, i32
  }
  func.func @transform_3(%arg0: i32) -> (i32, i32) {
    %c0_i32 = arith.constant 0 : i32
    %c0_i32_0 = arith.constant 0 : i32
    %c0_i32_1 = arith.constant 0 : i32
    return %c0_i32, %c0_i32_0 : i32, i32
  }
  func.func @transform_4(%arg0: i32) -> (i32, i32) {
    %c0_i32 = arith.constant 0 : i32
    %c0_i32_0 = arith.constant 0 : i32
    %c0_i32_1 = arith.constant 0 : i32
    return %c0_i32, %c0_i32_0 : i32, i32
  }
  func.func @transform_5(%arg0: i32) -> (i32, i32) {
    %c0_i32 = arith.constant 0 : i32
    %c0_i32_0 = arith.constant 0 : i32
    %c0_i32_1 = arith.constant 0 : i32
    return %c0_i32, %c0_i32_0 : i32, i32
  }
  func.func @transform_6(%arg0: i32) -> (i32, i32) {
    %c0_i32 = arith.constant 0 : i32
    %c0_i32_0 = arith.constant 0 : i32
    %c0_i32_1 = arith.constant 0 : i32
    return %c0_i32, %c0_i32_0 : i32, i32
  }
  func.func @transform_7(%arg0: i32) -> (i32, i32) {
    %c0_i32 = arith.constant 0 : i32
    %c0_i32_0 = arith.constant 0 : i32
    return %arg0, %c0_i32 : i32, i32
  }
}

</mosaic_0001>

<llo_original>
// kernel: tpu_custom_call.1
$region0: #{tpu_custom_call.1}
  #allocation0 [shape = 'u32[]', space=smem, size = 0x4, offset = 0x4, fixed_abs, tag = 'smem constant byte address 0x4 - core index']
  #allocation1 [shape = 'u32[144,128]{1,0:T(1,128)}', space=vmem, size = 0x12000, scoped, tag = 'internal scratch']
  %s0 = inlined_call_operand.hbm [shape: f32[8,128], index: 0, kind: input, shape index: {}]
  %s1 = inlined_call_operand.hbm [shape: bf16[128,256], index: 1, kind: input, shape index: {}]
  %s2 = inlined_call_operand.vmem [shape: f32[1,256], index: 2, kind: input, shape index: {}]
  %s3 = inlined_call_operand.hbm [shape: bf16[256,1024], index: 3, kind: input, shape index: {}]
  %s4 = inlined_call_operand.vmem [shape: f32[1,1024], index: 4, kind: input, shape index: {}]
  %s5 = inlined_call_operand.hbm [shape: bf16[1024,128], index: 5, kind: input, shape index: {}]
  %s6 = inlined_call_operand.vmem [shape: f32[1,128], index: 6, kind: input, shape index: {}]
  %s7 = inlined_call_operand.hbm [shape: f32[8,128], index: 7, kind: output, shape index: {}]
  %s8 = sld [smem:[#allocation0]]
  $region54: #{tpu_custom_call.1} parent=0
    _
  %s10 = ssub.s32 1, %s8
  %s11 = scalar_select 0, %s10, %s8
  $region1: #{tpu_custom_call.1} parent=0
    #allocation2 [shape = 'u8[4096]{0}', space=vmem, size = 0x1000, scoped, tag = 'input window, operand 0, single buffered']
    #allocation3 [shape = 's32[1]{0}', space=sflag, size = 0x4, scoped, tag = 'scoped memory for tpu_custom_call.1']
    #allocation4 [shape = 's32[1]{0}', space=sflag, size = 0x4, scoped, tag = 'scoped memory for tpu_custom_call.1']
    #allocation5 [shape = 'u8[65536]{0}', space=vmem, size = 0x10000, scoped, tag = 'input window, operand 1, single buffered']
    #allocation6 [shape = 's32[1]{0}', space=sflag, size = 0x4, scoped, tag = 'scoped memory for tpu_custom_call.1']
    #allocation7 [shape = 'u8[524288]{0}', space=vmem, size = 0x80000, scoped, tag = 'input window, operand 3, single buffered']
    #allocation8 [shape = 'u8[262144]{0}', space=vmem, size = 0x40000, scoped, tag = 'input window, operand 5, single buffered']
    #allocation9 [shape = 's32[1]{0}', space=sflag, size = 0x4, scoped, tag = 'scoped memory for tpu_custom_call.1']
    #allocation10 [shape = 'u8[4096]{0}', space=vmem, size = 0x1000, scoped, tag = 'output window, operand 0, single buffered']
    %12 = vsyncpa [#allocation3], 0
    %13 = vsyncpa [#allocation6], 0
    %14 = vsyncpa [#allocation9], 0
    %15 = vsyncpa [#allocation4], 0
    // Predicated region
    $region2: #{tpu_custom_call.1} parent=1 // pred_check
      _
    $region3: #{tpu_custom_call.1} parent=1 // pred_check_branch
      %17 = sbr.rel (0) target = $region5
    $region4: #{tpu_custom_call.1} parent=1 // pred_region
      %s19 = ssub.s32 128, 128
      %20 = vsyncadd [#allocation3], %s19
      %s22 = sshll.u32 [#allocation2], 4
      %s23 = int_to_ptr.vmem [resolvable:$true] %s22
      %25 = dma.hbm_to_vmem [thread:$0]  %s0, 128, %s23, [#allocation3]
    $region5: #{tpu_custom_call.1} parent=1 // pred_fallthru
      _
    // Predicated region
    $region6: #{tpu_custom_call.1} parent=1 // pred_check
      _
    $region7: #{tpu_custom_call.1} parent=1 // pred_check_branch
      %27 = sbr.rel (0) target = $region9
    $region8: #{tpu_custom_call.1} parent=1 // pred_region
      %s29 = ssub.s32 2048, 2048
      %30 = vsyncadd [#allocation6], %s29
      %s31 = sshll.u32 [#allocation5], 4
      %s32 = int_to_ptr.vmem [resolvable:$true] %s31
      %37 = dma.hbm_to_vmem [thread:$0]  %s1, 2048, %s32, [#allocation6], 128, 128, 8
    $region9: #{tpu_custom_call.1} parent=1 // pred_fallthru
      _
    // Predicated region
    $region10: #{tpu_custom_call.1} parent=1 // pred_check
      _
    $region11: #{tpu_custom_call.1} parent=1 // pred_check_branch
      %39 = sbr.rel (0) target = $region13
    $region12: #{tpu_custom_call.1} parent=1 // pred_region
      _
    $region13: #{tpu_custom_call.1} parent=1 // pred_fallthru
      _
    // Predicated region
    $region14: #{tpu_custom_call.1} parent=1 // pred_check
      _
    $region15: #{tpu_custom_call.1} parent=1 // pred_check_branch
      %41 = sbr.rel (0) target = $region17
    $region16: #{tpu_custom_call.1} parent=1 // pred_region
      %s43 = ssub.s32 16384, 16384
      %44 = vsyncadd [#allocation6], %s43
      %s45 = sshll.u32 [#allocation7], 4
      %s46 = int_to_ptr.vmem [resolvable:$true] %s45
      %51 = dma.hbm_to_vmem [thread:$0]  %s3, 16384, %s46, [#allocation6], 512, 512, 32
    $region17: #{tpu_custom_call.1} parent=1 // pred_fallthru
      _
    // Predicated region
    $region18: #{tpu_custom_call.1} parent=1 // pred_check
      _
    $region19: #{tpu_custom_call.1} parent=1 // pred_check_branch
      %53 = sbr.rel (0) target = $region21
    $region20: #{tpu_custom_call.1} parent=1 // pred_region
      _
    $region21: #{tpu_custom_call.1} parent=1 // pred_fallthru
      _
    // Predicated region
    $region22: #{tpu_custom_call.1} parent=1 // pred_check
      _
    $region23: #{tpu_custom_call.1} parent=1 // pred_check_branch
      %55 = sbr.rel (0) target = $region25
    $region24: #{tpu_custom_call.1} parent=1 // pred_region
      %s57 = ssub.s32 8192, 8192
      %58 = vsyncadd [#allocation9], %s57
      %s59 = sshll.u32 [#allocation8], 4
      %s60 = int_to_ptr.vmem [resolvable:$true] %s59
      %65 = dma.hbm_to_vmem [thread:$0]  %s5, 8192, %s60, [#allocation9], 64, 64, 4
    $region25: #{tpu_custom_call.1} parent=1 // pred_fallthru
      _
    // Predicated region
    $region26: #{tpu_custom_call.1} parent=1 // pred_check
      _
    $region27: #{tpu_custom_call.1} parent=1 // pred_check_branch
      %67 = sbr.rel (0) target = $region29
    $region28: #{tpu_custom_call.1} parent=1 // pred_region
      _
    $region29: #{tpu_custom_call.1} parent=1 // pred_fallthru
      _
    // Predicated region
    $region30: #{tpu_custom_call.1} parent=1 // pred_check
      _
    $region31: #{tpu_custom_call.1} parent=1 // pred_check_branch
      %69 = sbr.rel (0) target = $region33
    $region32: #{tpu_custom_call.1} parent=1 // pred_region
      %70 = dma.done [#allocation3], 128
    $region33: #{tpu_custom_call.1} parent=1 // pred_fallthru
      _
    // Predicated region
    $region34: #{tpu_custom_call.1} parent=1 // pred_check
      _
    $region35: #{tpu_custom_call.1} parent=1 // pred_check_branch
      %72 = sbr.rel (0) target = $region37
    $region36: #{tpu_custom_call.1} parent=1 // pred_region
      %73 = dma.done [#allocation6], 2048
    $region37: #{tpu_custom_call.1} parent=1 // pred_fallthru
      _
    // Predicated region
    $region38: #{tpu_custom_call.1} parent=1 // pred_check
      _
    $region39: #{tpu_custom_call.1} parent=1 // pred_check_branch
      %75 = sbr.rel (0) target = $region41
    $region40: #{tpu_custom_call.1} parent=1 // pred_region
      %76 = dma.done [#allocation6], 16384
    $region41: #{tpu_custom_call.1} parent=1 // pred_fallthru
      _
    // Predicated region
    $region42: #{tpu_custom_call.1} parent=1 // pred_check
      _
    $region43: #{tpu_custom_call.1} parent=1 // pred_check_branch
      %78 = sbr.rel (0) target = $region45
    $region44: #{tpu_custom_call.1} parent=1 // pred_region
      %79 = dma.done [#allocation9], 8192
    $region45: #{tpu_custom_call.1} parent=1 // pred_fallthru
      _
    %v81 = vld [vmem:[#allocation2] sm:$0xff]
    %v82 = vpack.c.bf16 %v81, %v81
    %v83 = vld [vmem:[#allocation5] sm:$0xff]
    %v84 = vld [vmem:[#allocation5 + $0x8] sm:$0xff]
    %v85 = vld [vmem:[#allocation5 + $0x10] sm:$0xff]
    %v86 = vld [vmem:[#allocation5 + $0x18] sm:$0xff]
    %v87 = vld [vmem:[#allocation5 + $0x20] sm:$0xff]
    %v88 = vld [vmem:[#allocation5 + $0x28] sm:$0xff]
    %v89 = vld [vmem:[#allocation5 + $0x30] sm:$0xff]
    %v90 = vld [vmem:[#allocation5 + $0x38] sm:$0xff]
    %v91 = vld [vmem:[#allocation5 + $0x40] sm:$0xff]
    %v92 = vld [vmem:[#allocation5 + $0x48] sm:$0xff]
    %v93 = vld [vmem:[#allocation5 + $0x50] sm:$0xff]
    %v94 = vld [vmem:[#allocation5 + $0x58] sm:$0xff]
    %v95 = vld [vmem:[#allocation5 + $0x60] sm:$0xff]
    %v96 = vld [vmem:[#allocation5 + $0x68] sm:$0xff]
    %v97 = vld [vmem:[#allocation5 + $0x70] sm:$0xff]
    %v98 = vld [vmem:[#allocation5 + $0x78] sm:$0xff]
    %v99 = vld [vmem:[%s2] sm:$0x3]
    %v101 = vlaneseq
    %v102 = vshrl.u32 %v101, 7
    %v103 = vsub.s32 0, %v102
    %v104 = vrot.slane %v99, %v103
    %v105 = vlaneseq
    %v106 = vshrl.u32 %v105, 7
    %v107 = vsub.s32 1, %v106
    %v108 = vrot.slane %v99, %v107
    %v127 = vunpack.c.l.b16 %v83
    %v128 = vunpack.c.h.b16 %v83
    %v129 = vunpack.c.l.b16 %v84
    %v130 = vunpack.c.h.b16 %v84
    %v131 = vunpack.c.l.b16 %v85
    %v132 = vunpack.c.h.b16 %v85
    %v133 = vunpack.c.l.b16 %v86
    %v134 = vunpack.c.h.b16 %v86
    %v135 = vunpack.c.l.b16 %v87
    %v136 = vunpack.c.h.b16 %v87
    %v137 = vunpack.c.l.b16 %v88
    %v138 = vunpack.c.h.b16 %v88
    %v139 = vunpack.c.l.b16 %v89
    %v140 = vunpack.c.h.b16 %v89
    %v141 = vunpack.c.l.b16 %v90
    %v142 = vunpack.c.h.b16 %v90
    %v143 = vunpack.c.l.b16 %v91
    %v144 = vunpack.c.h.b16 %v91
    %v145 = vunpack.c.l.b16 %v92
    %v146 = vunpack.c.h.b16 %v92
    %v147 = vunpack.c.l.b16 %v93
    %v148 = vunpack.c.h.b16 %v93
    %v149 = vunpack.c.l.b16 %v94
    %v150 = vunpack.c.h.b16 %v94
    %v151 = vunpack.c.l.b16 %v95
    %v152 = vunpack.c.h.b16 %v95
    %v153 = vunpack.c.l.b16 %v96
    %v154 = vunpack.c.h.b16 %v96
    %v155 = vunpack.c.l.b16 %v97
    %v156 = vunpack.c.h.b16 %v97
    %v157 = vunpack.c.l.b16 %v98
    %v158 = vunpack.c.h.b16 %v98
    %v159 = vpack.c.b16 %v129, %v127
    %v160 = vpack.c.b16 %v130, %v128
    %v161 = vpack.c.b16 %v133, %v131
    %v162 = vpack.c.b16 %v134, %v132
    %v163 = vpack.c.b16 %v137, %v135
    %v164 = vpack.c.b16 %v138, %v136
    %v165 = vpack.c.b16 %v141, %v139
    %v166 = vpack.c.b16 %v142, %v140
    %v167 = vpack.c.b16 %v145, %v143
    %v168 = vpack.c.b16 %v146, %v144
    %v169 = vpack.c.b16 %v149, %v147
    %v170 = vpack.c.b16 %v150, %v148
    %v171 = vpack.c.b16 %v153, %v151
    %v172 = vpack.c.b16 %v154, %v152
    %v173 = vpack.c.b16 %v157, %v155
    %v174 = vpack.c.b16 %v158, %v156
    %191 = vmatprep.subr.bf16.mxu0 %v160
    %192 = vmatpush1.bf16.msra.mxu0 %v159
    %193 = vmatprep.subr.bf16.mxu0 %v162
    %194 = vmatpush1.bf16.msra.mxu0 %v161
    %195 = vmatprep.subr.bf16.mxu0 %v164
    %196 = vmatpush1.bf16.msra.mxu0 %v163
    %197 = vmatprep.subr.bf16.mxu0 %v166
    %198 = vmatpush1.bf16.msra.mxu0 %v165
    %199 = vmatprep.subr.bf16.mxu0 %v168
    %200 = vmatpush1.bf16.msra.mxu0 %v167
    %201 = vmatprep.subr.bf16.mxu0 %v170
    %202 = vmatpush1.bf16.msra.mxu0 %v169
    %203 = vmatprep.subr.bf16.mxu0 %v172
    %204 = vmatpush1.bf16.msra.mxu0 %v171
    %205 = vmatprep.subr.bf16.mxu0 %v174
    %206 = vmatpush1.bf16.msra.mxu0 %v173
    %207 = vmatprep.subr.bf16.mxu0 0
    %208 = vmatpush1.bf16.msra.mxu0 0
    %209 = vmatprep.subr.bf16.mxu0 0
    %210 = vmatpush1.bf16.msra.mxu0 0
    %211 = vmatprep.subr.bf16.mxu0 0
    %212 = vmatpush1.bf16.msra.mxu0 0
    %213 = vmatprep.subr.bf16.mxu0 0
    %214 = vmatpush1.bf16.msra.mxu0 0
    %215 = vmatprep.subr.bf16.mxu0 0
    %216 = vmatpush1.bf16.msra.mxu0 0
    %217 = vmatprep.subr.bf16.mxu0 0
    %218 = vmatpush1.bf16.msra.mxu0 0
    %219 = vmatprep.subr.bf16.mxu0 0
    %220 = vmatpush1.bf16.msra.mxu0 0
    %221 = vmatprep.subr.bf16.mxu0 0
    %222 = vmatpush1.bf16.msra.mxu0 0
    %223 = vmatprep.mubr.bf16.mxu0 0
    %224 = vmatmul.mubr.bf16.gmra.mrb[0].mxu0 %v82
    %v225 = vpop.f32.mrb[0].mxu0
    %v226 = vadd.f32 %v104, %v225
    %v227 = vpop.f32.mrb[0].mxu0
    %v228 = vadd.f32 %v108, %v227
    %v229 = vpop.f32.mrb[0].mxu0
    %v230 = vpop.f32.mrb[0].mxu0
    %231 = vdwg.mxu0
    %vm232 = vcmp.gt.f32.partialorder %v226, 0.0
    %vm233 = vcmp.gt.f32.partialorder %v228, 0.0
    %v234 = vmul.f32 %v226, 0.01
    %v235 = vmul.f32 %v228, 0.01
    %v236 = vsel %vm232, %v226, %v234
    %v237 = vsel %vm233, %v228, %v235
    %v238 = vpack.c.bf16 %v236, %v236
    %v239 = vpack.c.bf16 %v237, %v237
    %v240 = vld [vmem:[#allocation7] sm:$0xff]
    %v241 = vld [vmem:[#allocation7 + $0x8] sm:$0xff]
    %v242 = vld [vmem:[#allocation7 + $0x10] sm:$0xff]
    %v243 = vld [vmem:[#allocation7 + $0x18] sm:$0xff]
    %v244 = vld [vmem:[#allocation7 + $0x20] sm:$0xff]
    %v245 = vld [vmem:[#allocation7 + $0x28] sm:$0xff]
    %v246 = vld [vmem:[#allocation7 + $0x30] sm:$0xff]
    %v247 = vld [vmem:[#allocation7 + $0x38] sm:$0xff]
    %v248 = vld [vmem:[#allocation7 + $0x40] sm:$0xff]
    %v249 = vld [vmem:[#allocation7 + $0x48] sm:$0xff]
    %v250 = vld [vmem:[#allocation7 + $0x50] sm:$0xff]
    %v251 = vld [vmem:[#allocation7 + $0x58] sm:$0xff]
    %v252 = vld [vmem:[#allocation7 + $0x60] sm:$0xff]
    %v253 = vld [vmem:[#allocation7 + $0x68] sm:$0xff]
    %v254 = vld [vmem:[#allocation7 + $0x70] sm:$0xff]
    %v255 = vld [vmem:[#allocation7 + $0x78] sm:$0xff]
    %v256 = vld [vmem:[#allocation7 + $0x80] sm:$0xff]
    %v257 = vld [vmem:[#allocation7 + $0x88] sm:$0xff]
    %v258 = vld [vmem:[#allocation7 + $0x90] sm:$0xff]
    %v259 = vld [vmem:[#allocation7 + $0x98] sm:$0xff]
    %v260 = vld [vmem:[#allocation7 + $0xa0] sm:$0xff]
    %v261 = vld [vmem:[#allocation7 + $0xa8] sm:$0xff]
    %v262 = vld [vmem:[#allocation7 + $0xb0] sm:$0xff]
    %v263 = vld [vmem:[#allocation7 + $0xb8] sm:$0xff]
    %v264 = vld [vmem:[#allocation7 + $0xc0] sm:$0xff]
    %v265 = vld [vmem:[#allocation7 + $0xc8] sm:$0xff]
    %v266 = vld [vmem:[#allocation7 + $0xd0] sm:$0xff]
    %v267 = vld [vmem:[#allocation7 + $0xd8] sm:$0xff]
    %v268 = vld [vmem:[#allocation7 + $0xe0] sm:$0xff]
    %v269 = vld [vmem:[#allocation7 + $0xe8] sm:$0xff]
    %v270 = vld [vmem:[#allocation7 + $0xf0] sm:$0xff]
    %v271 = vld [vmem:[#allocation7 + $0xf8] sm:$0xff]
    %v272 = vld [vmem:[#allocation7 + $0x100] sm:$0xff]
    %v273 = vld [vmem:[#allocation7 + $0x108] sm:$0xff]
    %v274 = vld [vmem:[#allocation7 + $0x110] sm:$0xff]
    %v275 = vld [vmem:[#allocation7 + $0x118] sm:$0xff]
    %v276 = vld [vmem:[#allocation7 + $0x120] sm:$0xff]
    %v277 = vld [vmem:[#allocation7 + $0x128] sm:$0xff]
    %v278 = vld [vmem:[#allocation7 + $0x130] sm:$0xff]
    %v279 = vld [vmem:[#allocation7 + $0x138] sm:$0xff]
    %v280 = vld [vmem:[#allocation7 + $0x140] sm:$0xff]
    %v281 = vld [vmem:[#allocation7 + $0x148] sm:$0xff]
    %v282 = vld [vmem:[#allocation7 + $0x150] sm:$0xff]
    %v283 = vld [vmem:[#allocation7 + $0x158] sm:$0xff]
    %v284 = vld [vmem:[#allocation7 + $0x160] sm:$0xff]
    %v285 = vld [vmem:[#allocation7 + $0x168] sm:$0xff]
    %v286 = vld [vmem:[#allocation7 + $0x170] sm:$0xff]
    %v287 = vld [vmem:[#allocation7 + $0x178] sm:$0xff]
    %v288 = vld [vmem:[#allocation7 + $0x180] sm:$0xff]
    %v289 = vld [vmem:[#allocation7 + $0x188] sm:$0xff]
    %v290 = vld [vmem:[#allocation7 + $0x190] sm:$0xff]
    %v291 = vld [vmem:[#allocation7 + $0x198] sm:$0xff]
    %v292 = vld [vmem:[#allocation7 + $0x1a0] sm:$0xff]
    %v293 = vld [vmem:[#allocation7 + $0x1a8] sm:$0xff]
    %v294 = vld [vmem:[#allocation7 + $0x1b0] sm:$0xff]
    %v295 = vld [vmem:[#allocation7 + $0x1b8] sm:$0xff]
    %v296 = vld [vmem:[#allocation7 + $0x1c0] sm:$0xff]
    %v297 = vld [vmem:[#allocation7 + $0x1c8] sm:$0xff]
    %v298 = vld [vmem:[#allocation7 + $0x1d0] sm:$0xff]
    %v299 = vld [vmem:[#allocation7 + $0x1d8] sm:$0xff]
    %v300 = vld [vmem:[#allocation7 + $0x1e0] sm:$0xff]
    %v301 = vld [vmem:[#allocation7 + $0x1e8] sm:$0xff]
    %v302 = vld [vmem:[#allocation7 + $0x1f0] sm:$0xff]
    %v303 = vld [vmem:[#allocation7 + $0x1f8] sm:$0xff]
    %v304 = vld [vmem:[#allocation7 + $0x200] sm:$0xff]
    %v305 = vld [vmem:[#allocation7 + $0x208] sm:$0xff]
    %v306 = vld [vmem:[#allocation7 + $0x210] sm:$0xff]
    %v307 = vld [vmem:[#allocation7 + $0x218] sm:$0xff]
    %v308 = vld [vmem:[#allocation7 + $0x220] sm:$0xff]
    %v309 = vld [vmem:[#allocation7 + $0x228] sm:$0xff]
    %v310 = vld [vmem:[#allocation7 + $0x230] sm:$0xff]
    %v311 = vld [vmem:[#allocation7 + $0x238] sm:$0xff]
    %v312 = vld [vmem:[#allocation7 + $0x240] sm:$0xff]
    %v313 = vld [vmem:[#allocation7 + $0x248] sm:$0xff]
    %v314 = vld [vmem:[#allocation7 + $0x250] sm:$0xff]
    %v315 = vld [vmem:[#allocation7 + $0x258] sm:$0xff]
    %v316 = vld [vmem:[#allocation7 + $0x260] sm:$0xff]
    %v317 = vld [vmem:[#allocation7 + $0x268] sm:$0xff]
    %v318 = vld [vmem:[#allocation7 + $0x270] sm:$0xff]
    %v319 = vld [vmem:[#allocation7 + $0x278] sm:$0xff]
    %v320 = vld [vmem:[#allocation7 + $0x280] sm:$0xff]
    %v321 = vld [vmem:[#allocation7 + $0x288] sm:$0xff]
    %v322 = vld [vmem:[#allocation7 + $0x290] sm:$0xff]
    %v323 = vld [vmem:[#allocation7 + $0x298] sm:$0xff]
    %v324 = vld [vmem:[#allocation7 + $0x2a0] sm:$0xff]
    %v325 = vld [vmem:[#allocation7 + $0x2a8] sm:$0xff]
    %v326 = vld [vmem:[#allocation7 + $0x2b0] sm:$0xff]
    %v327 = vld [vmem:[#allocation7 + $0x2b8] sm:$0xff]
    %v328 = vld [vmem:[#allocation7 + $0x2c0] sm:$0xff]
    %v329 = vld [vmem:[#allocation7 + $0x2c8] sm:$0xff]
    %v330 = vld [vmem:[#allocation7 + $0x2d0] sm:$0xff]
    %v331 = vld [vmem:[#allocation7 + $0x2d8] sm:$0xff]
    %v332 = vld [vmem:[#allocation7 + $0x2e0] sm:$0xff]
    %v333 = vld [vmem:[#allocation7 + $0x2e8] sm:$0xff]
    %v334 = vld [vmem:[#allocation7 + $0x2f0] sm:$0xff]
    %v335 = vld [vmem:[#allocation7 + $0x2f8] sm:$0xff]
    %v336 = vld [vmem:[#allocation7 + $0x300] sm:$0xff]
    %v337 = vld [vmem:[#allocation7 + $0x308] sm:$0xff]
    %v338 = vld [vmem:[#allocation7 + $0x310] sm:$0xff]
    %v339 = vld [vmem:[#allocation7 + $0x318] sm:$0xff]
    %v340 = vld [vmem:[#allocation7 + $0x320] sm:$0xff]
    %v341 = vld [vmem:[#allocation7 + $0x328] sm:$0xff]
    %v342 = vld [vmem:[#allocation7 + $0x330] sm:$0xff]
    %v343 = vld [vmem:[#allocation7 + $0x338] sm:$0xff]
    %v344 = vld [vmem:[#allocation7 + $0x340] sm:$0xff]
    %v345 = vld [vmem:[#allocation7 + $0x348] sm:$0xff]
    %v346 = vld [vmem:[#allocation7 + $0x350] sm:$0xff]
    %v347 = vld [vmem:[#allocation7 + $0x358] sm:$0xff]
    %v348 = vld [vmem:[#allocation7 + $0x360] sm:$0xff]
    %v349 = vld [vmem:[#allocation7 + $0x368] sm:$0xff]
    %v350 = vld [vmem:[#allocation7 + $0x370] sm:$0xff]
    %v351 = vld [vmem:[#allocation7 + $0x378] sm:$0xff]
    %v352 = vld [vmem:[#allocation7 + $0x380] sm:$0xff]
    %v353 = vld [vmem:[#allocation7 + $0x388] sm:$0xff]
    %v354 = vld [vmem:[#allocation7 + $0x390] sm:$0xff]
    %v355 = vld [vmem:[#allocation7 + $0x398] sm:$0xff]
    %v356 = vld [vmem:[#allocation7 + $0x3a0] sm:$0xff]
    %v357 = vld [vmem:[#allocation7 + $0x3a8] sm:$0xff]
    %v358 = vld [vmem:[#allocation7 + $0x3b0] sm:$0xff]
    %v359 = vld [vmem:[#allocation7 + $0x3b8] sm:$0xff]
    %v360 = vld [vmem:[#allocation7 + $0x3c0] sm:$0xff]
    %v361 = vld [vmem:[#allocation7 + $0x3c8] sm:$0xff]
    %v362 = vld [vmem:[#allocation7 + $0x3d0] sm:$0xff]
    %v363 = vld [vmem:[#allocation7 + $0x3d8] sm:$0xff]
    %v364 = vld [vmem:[#allocation7 + $0x3e0] sm:$0xff]
    %v365 = vld [vmem:[#allocation7 + $0x3e8] sm:$0xff]
    %v366 = vld [vmem:[#allocation7 + $0x3f0] sm:$0xff]
    %v367 = vld [vmem:[#allocation7 + $0x3f8] sm:$0xff]
    %v368 = vld [vmem:[%s4] sm:$0xff]
    %v370 = vlaneseq
    %v371 = vshrl.u32 %v370, 7
    %v372 = vsub.s32 0, %v371
    %v373 = vrot.slane %v368, %v372
    %v374 = vlaneseq
    %v375 = vshrl.u32 %v374, 7
    %v376 = vsub.s32 1, %v375
    %v377 = vrot.slane %v368, %v376
    %v378 = vlaneseq
    %v379 = vshrl.u32 %v378, 7
    %v380 = vsub.s32 2, %v379
    %v381 = vrot.slane %v368, %v380
    %v382 = vlaneseq
    %v383 = vshrl.u32 %v382, 7
    %v384 = vsub.s32 3, %v383
    %v385 = vrot.slane %v368, %v384
    %v386 = vlaneseq
    %v387 = vshrl.u32 %v386, 7
    %v388 = vsub.s32 4, %v387
    %v389 = vrot.slane %v368, %v388
    %v390 = vlaneseq
    %v391 = vshrl.u32 %v390, 7
    %v392 = vsub.s32 5, %v391
    %v393 = vrot.slane %v368, %v392
    %v394 = vlaneseq
    %v395 = vshrl.u32 %v394, 7
    %v396 = vsub.s32 6, %v395
    %v397 = vrot.slane %v368, %v396
    %v398 = vlaneseq
    %v399 = vshrl.u32 %v398, 7
    %v400 = vsub.s32 7, %v399
    %v401 = vrot.slane %v368, %v400
    %v538 = vunpack.c.l.b16 %v240
    %v539 = vunpack.c.h.b16 %v240
    %v540 = vunpack.c.l.b16 %v241
    %v541 = vunpack.c.h.b16 %v241
    %v542 = vunpack.c.l.b16 %v242
    %v543 = vunpack.c.h.b16 %v242
    %v544 = vunpack.c.l.b16 %v243
    %v545 = vunpack.c.h.b16 %v243
    %v546 = vunpack.c.l.b16 %v244
    %v547 = vunpack.c.h.b16 %v244
    %v548 = vunpack.c.l.b16 %v245
    %v549 = vunpack.c.h.b16 %v245
    %v550 = vunpack.c.l.b16 %v246
    %v551 = vunpack.c.h.b16 %v246
    %v552 = vunpack.c.l.b16 %v247
    %v553 = vunpack.c.h.b16 %v247
    %v554 = vunpack.c.l.b16 %v248
    %v555 = vunpack.c.h.b16 %v248
    %v556 = vunpack.c.l.b16 %v249
    %v557 = vunpack.c.h.b16 %v249
    %v558 = vunpack.c.l.b16 %v250
    %v559 = vunpack.c.h.b16 %v250
    %v560 = vunpack.c.l.b16 %v251
    %v561 = vunpack.c.h.b16 %v251
    %v562 = vunpack.c.l.b16 %v252
    %v563 = vunpack.c.h.b16 %v252
    %v564 = vunpack.c.l.b16 %v253
    %v565 = vunpack.c.h.b16 %v253
    %v566 = vunpack.c.l.b16 %v254
    %v567 = vunpack.c.h.b16 %v254
    %v568 = vunpack.c.l.b16 %v255
    %v569 = vunpack.c.h.b16 %v255
    %v570 = vunpack.c.l.b16 %v256
    %v571 = vunpack.c.h.b16 %v256
    %v572 = vunpack.c.l.b16 %v257
    %v573 = vunpack.c.h.b16 %v257
    %v574 = vunpack.c.l.b16 %v258
    %v575 = vunpack.c.h.b16 %v258
    %v576 = vunpack.c.l.b16 %v259
    %v577 = vunpack.c.h.b16 %v259
    %v578 = vunpack.c.l.b16 %v260
    %v579 = vunpack.c.h.b16 %v260
    %v580 = vunpack.c.l.b16 %v261
    %v581 = vunpack.c.h.b16 %v261
    %v582 = vunpack.c.l.b16 %v262
    %v583 = vunpack.c.h.b16 %v262
    %v584 = vunpack.c.l.b16 %v263
    %v585 = vunpack.c.h.b16 %v263
    %v586 = vunpack.c.l.b16 %v264
    %v587 = vunpack.c.h.b16 %v264
    %v588 = vunpack.c.l.b16 %v265
    %v589 = vunpack.c.h.b16 %v265
    %v590 = vunpack.c.l.b16 %v266
    %v591 = vunpack.c.h.b16 %v266
    %v592 = vunpack.c.l.b16 %v267
    %v593 = vunpack.c.h.b16 %v267
    %v594 = vunpack.c.l.b16 %v268
    %v595 = vunpack.c.h.b16 %v268
    %v596 = vunpack.c.l.b16 %v269
    %v597 = vunpack.c.h.b16 %v269
    %v598 = vunpack.c.l.b16 %v270
    %v599 = vunpack.c.h.b16 %v270
    %v600 = vunpack.c.l.b16 %v271
    %v601 = vunpack.c.h.b16 %v271
    %v602 = vunpack.c.l.b16 %v272
    %v603 = vunpack.c.h.b16 %v272
    %v604 = vunpack.c.l.b16 %v273
    %v605 = vunpack.c.h.b16 %v273
    %v606 = vunpack.c.l.b16 %v274
    %v607 = vunpack.c.h.b16 %v274
    %v608 = vunpack.c.l.b16 %v275
    %v609 = vunpack.c.h.b16 %v275
    %v610 = vunpack.c.l.b16 %v276
    %v611 = vunpack.c.h.b16 %v276
    %v612 = vunpack.c.l.b16 %v277
    %v613 = vunpack.c.h.b16 %v277
    %v614 = vunpack.c.l.b16 %v278
    %v615 = vunpack.c.h.b16 %v278
    %v616 = vunpack.c.l.b16 %v279
    %v617 = vunpack.c.h.b16 %v279
    %v618 = vunpack.c.l.b16 %v280
    %v619 = vunpack.c.h.b16 %v280
    %v620 = vunpack.c.l.b16 %v281
    %v621 = vunpack.c.h.b16 %v281
    %v622 = vunpack.c.l.b16 %v282
    %v623 = vunpack.c.h.b16 %v282
    %v624 = vunpack.c.l.b16 %v283
    %v625 = vunpack.c.h.b16 %v283
    %v626 = vunpack.c.l.b16 %v284
    %v627 = vunpack.c.h.b16 %v284
    %v628 = vunpack.c.l.b16 %v285
    %v629 = vunpack.c.h.b16 %v285
    %v630 = vunpack.c.l.b16 %v286
    %v631 = vunpack.c.h.b16 %v286
    %v632 = vunpack.c.l.b16 %v287
    %v633 = vunpack.c.h.b16 %v287
    %v634 = vunpack.c.l.b16 %v288
    %v635 = vunpack.c.h.b16 %v288
    %v636 = vunpack.c.l.b16 %v289
    %v637 = vunpack.c.h.b16 %v289
    %v638 = vunpack.c.l.b16 %v290
    %v639 = vunpack.c.h.b16 %v290
    %v640 = vunpack.c.l.b16 %v291
    %v641 = vunpack.c.h.b16 %v291
    %v642 = vunpack.c.l.b16 %v292
    %v643 = vunpack.c.h.b16 %v292
    %v644 = vunpack.c.l.b16 %v293
    %v645 = vunpack.c.h.b16 %v293
    %v646 = vunpack.c.l.b16 %v294
    %v647 = vunpack.c.h.b16 %v294
    %v648 = vunpack.c.l.b16 %v295
    %v649 = vunpack.c.h.b16 %v295
    %v650 = vunpack.c.l.b16 %v296
    %v651 = vunpack.c.h.b16 %v296
    %v652 = vunpack.c.l.b16 %v297
    %v653 = vunpack.c.h.b16 %v297
    %v654 = vunpack.c.l.b16 %v298
    %v655 = vunpack.c.h.b16 %v298
    %v656 = vunpack.c.l.b16 %v299
    %v657 = vunpack.c.h.b16 %v299
    %v658 = vunpack.c.l.b16 %v300
    %v659 = vunpack.c.h.b16 %v300
    %v660 = vunpack.c.l.b16 %v301
    %v661 = vunpack.c.h.b16 %v301
    %v662 = vunpack.c.l.b16 %v302
    %v663 = vunpack.c.h.b16 %v302
    %v664 = vunpack.c.l.b16 %v303
    %v665 = vunpack.c.h.b16 %v303
    %v666 = vunpack.c.l.b16 %v304
    %v667 = vunpack.c.h.b16 %v304
    %v668 = vunpack.c.l.b16 %v305
    %v669 = vunpack.c.h.b16 %v305
    %v670 = vunpack.c.l.b16 %v306
    %v671 = vunpack.c.h.b16 %v306
    %v672 = vunpack.c.l.b16 %v307
    %v673 = vunpack.c.h.b16 %v307
    %v674 = vunpack.c.l.b16 %v308
    %v675 = vunpack.c.h.b16 %v308
    %v676 = vunpack.c.l.b16 %v309
    %v677 = vunpack.c.h.b16 %v309
    %v678 = vunpack.c.l.b16 %v310
    %v679 = vunpack.c.h.b16 %v310
    %v680 = vunpack.c.l.b16 %v311
    %v681 = vunpack.c.h.b16 %v311
    %v682 = vunpack.c.l.b16 %v312
    %v683 = vunpack.c.h.b16 %v312
    %v684 = vunpack.c.l.b16 %v313
    %v685 = vunpack.c.h.b16 %v313
    %v686 = vunpack.c.l.b16 %v314
    %v687 = vunpack.c.h.b16 %v314
    %v688 = vunpack.c.l.b16 %v315
    %v689 = vunpack.c.h.b16 %v315
    %v690 = vunpack.c.l.b16 %v316
    %v691 = vunpack.c.h.b16 %v316
    %v692 = vunpack.c.l.b16 %v317
    %v693 = vunpack.c.h.b16 %v317
    %v694 = vunpack.c.l.b16 %v318
    %v695 = vunpack.c.h.b16 %v318
    %v696 = vunpack.c.l.b16 %v319
    %v697 = vunpack.c.h.b16 %v319
    %v698 = vunpack.c.l.b16 %v320
    %v699 = vunpack.c.h.b16 %v320
    %v700 = vunpack.c.l.b16 %v321
    %v701 = vunpack.c.h.b16 %v321
    %v702 = vunpack.c.l.b16 %v322
    %v703 = vunpack.c.h.b16 %v322
    %v704 = vunpack.c.l.b16 %v323
    %v705 = vunpack.c.h.b16 %v323
    %v706 = vunpack.c.l.b16 %v324
    %v707 = vunpack.c.h.b16 %v324
    %v708 = vunpack.c.l.b16 %v325
    %v709 = vunpack.c.h.b16 %v325
    %v710 = vunpack.c.l.b16 %v326
    %v711 = vunpack.c.h.b16 %v326
    %v712 = vunpack.c.l.b16 %v327
    %v713 = vunpack.c.h.b16 %v327
    %v714 = vunpack.c.l.b16 %v328
    %v715 = vunpack.c.h.b16 %v328
    %v716 = vunpack.c.l.b16 %v329
    %v717 = vunpack.c.h.b16 %v329
    %v718 = vunpack.c.l.b16 %v330
    %v719 = vunpack.c.h.b16 %v330
    %v720 = vunpack.c.l.b16 %v331
    %v721 = vunpack.c.h.b16 %v331
    %v722 = vunpack.c.l.b16 %v332
    %v723 = vunpack.c.h.b16 %v332
    %v724 = vunpack.c.l.b16 %v333
    %v725 = vunpack.c.h.b16 %v333
    %v726 = vunpack.c.l.b16 %v334
    %v727 = vunpack.c.h.b16 %v334
    %v728 = vunpack.c.l.b16 %v335
    %v729 = vunpack.c.h.b16 %v335
    %v730 = vunpack.c.l.b16 %v336
    %v731 = vunpack.c.h.b16 %v336
    %v732 = vunpack.c.l.b16 %v337
    %v733 = vunpack.c.h.b16 %v337
    %v734 = vunpack.c.l.b16 %v338
    %v735 = vunpack.c.h.b16 %v338
    %v736 = vunpack.c.l.b16 %v339
    %v737 = vunpack.c.h.b16 %v339
    %v738 = vunpack.c.l.b16 %v340
    %v739 = vunpack.c.h.b16 %v340
    %v740 = vunpack.c.l.b16 %v341
    %v741 = vunpack.c.h.b16 %v341
    %v742 = vunpack.c.l.b16 %v342
    %v743 = vunpack.c.h.b16 %v342
    %v744 = vunpack.c.l.b16 %v343
    %v745 = vunpack.c.h.b16 %v343
    %v746 = vunpack.c.l.b16 %v344
    %v747 = vunpack.c.h.b16 %v344
    %v748 = vunpack.c.l.b16 %v345
    %v749 = vunpack.c.h.b16 %v345
    %v750 = vunpack.c.l.b16 %v346
    %v751 = vunpack.c.h.b16 %v346
    %v752 = vunpack.c.l.b16 %v347
    %v753 = vunpack.c.h.b16 %v347
    %v754 = vunpack.c.l.b16 %v348
    %v755 = vunpack.c.h.b16 %v348
    %v756 = vunpack.c.l.b16 %v349
    %v757 = vunpack.c.h.b16 %v349
    %v758 = vunpack.c.l.b16 %v350
    %v759 = vunpack.c.h.b16 %v350
    %v760 = vunpack.c.l.b16 %v351
    %v761 = vunpack.c.h.b16 %v351
    %v762 = vunpack.c.l.b16 %v352
    %v763 = vunpack.c.h.b16 %v352
    %v764 = vunpack.c.l.b16 %v353
    %v765 = vunpack.c.h.b16 %v353
    %v766 = vunpack.c.l.b16 %v354
    %v767 = vunpack.c.h.b16 %v354
    %v768 = vunpack.c.l.b16 %v355
    %v769 = vunpack.c.h.b16 %v355
    %v770 = vunpack.c.l.b16 %v356
    %v771 = vunpack.c.h.b16 %v356
    %v772 = vunpack.c.l.b16 %v357
    %v773 = vunpack.c.h.b16 %v357
    %v774 = vunpack.c.l.b16 %v358
    %v775 = vunpack.c.h.b16 %v358
    %v776 = vunpack.c.l.b16 %v359
    %v777 = vunpack.c.h.b16 %v359
    %v778 = vunpack.c.l.b16 %v360
    %v779 = vunpack.c.h.b16 %v360
    %v780 = vunpack.c.l.b16 %v361
    %v781 = vunpack.c.h.b16 %v361
    %v782 = vunpack.c.l.b16 %v362
    %v783 = vunpack.c.h.b16 %v362
    %v784 = vunpack.c.l.b16 %v363
    %v785 = vunpack.c.h.b16 %v363
    %v786 = vunpack.c.l.b16 %v364
    %v787 = vunpack.c.h.b16 %v364
    %v788 = vunpack.c.l.b16 %v365
    %v789 = vunpack.c.h.b16 %v365
    %v790 = vunpack.c.l.b16 %v366
    %v791 = vunpack.c.h.b16 %v366
    %v792 = vunpack.c.l.b16 %v367
    %v793 = vunpack.c.h.b16 %v367
    %v794 = vpack.c.b16 %v546, %v538
    %v795 = vpack.c.b16 %v547, %v539
    %v796 = vpack.c.b16 %v548, %v540
    %v797 = vpack.c.b16 %v549, %v541
    %v798 = vpack.c.b16 %v550, %v542
    %v799 = vpack.c.b16 %v551, %v543
    %v800 = vpack.c.b16 %v552, %v544
    %v801 = vpack.c.b16 %v553, %v545
    %v802 = vpack.c.b16 %v562, %v554
    %v803 = vpack.c.b16 %v563, %v555
    %v804 = vpack.c.b16 %v564, %v556
    %v805 = vpack.c.b16 %v565, %v557
    %v806 = vpack.c.b16 %v566, %v558
    %v807 = vpack.c.b16 %v567, %v559
    %v808 = vpack.c.b16 %v568, %v560
    %v809 = vpack.c.b16 %v569, %v561
    %v810 = vpack.c.b16 %v578, %v570
    %v811 = vpack.c.b16 %v579, %v571
    %v812 = vpack.c.b16 %v580, %v572
    %v813 = vpack.c.b16 %v581, %v573
    %v814 = vpack.c.b16 %v582, %v574
    %v815 = vpack.c.b16 %v583, %v575
    %v816 = vpack.c.b16 %v584, %v576
    %v817 = vpack.c.b16 %v585, %v577
    %v818 = vpack.c.b16 %v594, %v586
    %v819 = vpack.c.b16 %v595, %v587
    %v820 = vpack.c.b16 %v596, %v588
    %v821 = vpack.c.b16 %v597, %v589
    %v822 = vpack.c.b16 %v598, %v590
    %v823 = vpack.c.b16 %v599, %v591
    %v824 = vpack.c.b16 %v600, %v592
    %v825 = vpack.c.b16 %v601, %v593
    %v826 = vpack.c.b16 %v610, %v602
    %v827 = vpack.c.b16 %v611, %v603
    %v828 = vpack.c.b16 %v612, %v604
    %v829 = vpack.c.b16 %v613, %v605
    %v830 = vpack.c.b16 %v614, %v606
    %v831 = vpack.c.b16 %v615, %v607
    %v832 = vpack.c.b16 %v616, %v608
    %v833 = vpack.c.b16 %v617, %v609
    %v834 = vpack.c.b16 %v626, %v618
    %v835 = vpack.c.b16 %v627, %v619
    %v836 = vpack.c.b16 %v628, %v620
    %v837 = vpack.c.b16 %v629, %v621
    %v838 = vpack.c.b16 %v630, %v622
    %v839 = vpack.c.b16 %v631, %v623
    %v840 = vpack.c.b16 %v632, %v624
    %v841 = vpack.c.b16 %v633, %v625
    %v842 = vpack.c.b16 %v642, %v634
    %v843 = vpack.c.b16 %v643, %v635
    %v844 = vpack.c.b16 %v644, %v636
    %v845 = vpack.c.b16 %v645, %v637
    %v846 = vpack.c.b16 %v646, %v638
    %v847 = vpack.c.b16 %v647, %v639
    %v848 = vpack.c.b16 %v648, %v640
    %v849 = vpack.c.b16 %v649, %v641
    %v850 = vpack.c.b16 %v658, %v650
    %v851 = vpack.c.b16 %v659, %v651
    %v852 = vpack.c.b16 %v660, %v652
    %v853 = vpack.c.b16 %v661, %v653
    %v854 = vpack.c.b16 %v662, %v654
    %v855 = vpack.c.b16 %v663, %v655
    %v856 = vpack.c.b16 %v664, %v656
    %v857 = vpack.c.b16 %v665, %v657
    %v858 = vpack.c.b16 %v674, %v666
    %v859 = vpack.c.b16 %v675, %v667
    %v860 = vpack.c.b16 %v676, %v668
    %v861 = vpack.c.b16 %v677, %v669
    %v862 = vpack.c.b16 %v678, %v670
    %v863 = vpack.c.b16 %v679, %v671
    %v864 = vpack.c.b16 %v680, %v672
    %v865 = vpack.c.b16 %v681, %v673
    %v866 = vpack.c.b16 %v690, %v682
    %v867 = vpack.c.b16 %v691, %v683
    %v868 = vpack.c.b16 %v692, %v684
    %v869 = vpack.c.b16 %v693, %v685
    %v870 = vpack.c.b16 %v694, %v686
    %v871 = vpack.c.b16 %v695, %v687
    %v872 = vpack.c.b16 %v696, %v688
    %v873 = vpack.c.b16 %v697, %v689
    %v874 = vpack.c.b16 %v706, %v698
    %v875 = vpack.c.b16 %v707, %v699
    %v876 = vpack.c.b16 %v708, %v700
    %v877 = vpack.c.b16 %v709, %v701
    %v878 = vpack.c.b16 %v710, %v702
    %v879 = vpack.c.b16 %v711, %v703
    %v880 = vpack.c.b16 %v712, %v704
    %v881 = vpack.c.b16 %v713, %v705
    %v882 = vpack.c.b16 %v722, %v714
    %v883 = vpack.c.b16 %v723, %v715
    %v884 = vpack.c.b16 %v724, %v716
    %v885 = vpack.c.b16 %v725, %v717
    %v886 = vpack.c.b16 %v726, %v718
    %v887 = vpack.c.b16 %v727, %v719
    %v888 = vpack.c.b16 %v728, %v720
    %v889 = vpack.c.b16 %v729, %v721
    %v890 = vpack.c.b16 %v738, %v730
    %v891 = vpack.c.b16 %v739, %v731
    %v892 = vpack.c.b16 %v740, %v732
    %v893 = vpack.c.b16 %v741, %v733
    %v894 = vpack.c.b16 %v742, %v734
    %v895 = vpack.c.b16 %v743, %v735
    %v896 = vpack.c.b16 %v744, %v736
    %v897 = vpack.c.b16 %v745, %v737
    %v898 = vpack.c.b16 %v754, %v746
    %v899 = vpack.c.b16 %v755, %v747
    %v900 = vpack.c.b16 %v756, %v748
    %v901 = vpack.c.b16 %v757, %v749
    %v902 = vpack.c.b16 %v758, %v750
    %v903 = vpack.c.b16 %v759, %v751
    %v904 = vpack.c.b16 %v760, %v752
    %v905 = vpack.c.b16 %v761, %v753
    %v906 = vpack.c.b16 %v770, %v762
    %v907 = vpack.c.b16 %v771, %v763
    %v908 = vpack.c.b16 %v772, %v764
    %v909 = vpack.c.b16 %v773, %v765
    %v910 = vpack.c.b16 %v774, %v766
    %v911 = vpack.c.b16 %v775, %v767
    %v912 = vpack.c.b16 %v776, %v768
    %v913 = vpack.c.b16 %v777, %v769
    %v914 = vpack.c.b16 %v786, %v778
    %v915 = vpack.c.b16 %v787, %v779
    %v916 = vpack.c.b16 %v788, %v780
    %v917 = vpack.c.b16 %v789, %v781
    %v918 = vpack.c.b16 %v790, %v782
    %v919 = vpack.c.b16 %v791, %v783
    %v920 = vpack.c.b16 %v792, %v784
    %v921 = vpack.c.b16 %v793, %v785
    %1050 = vmatprep.subr.bf16.mxu0 %v795
    %1051 = vmatpush1.bf16.msra.mxu0 %v794
    %1052 = vmatprep.subr.bf16.mxu0 %v803
    %1053 = vmatpush1.bf16.msra.mxu0 %v802
    %1054 = vmatprep.subr.bf16.mxu0 %v811
    %1055 = vmatpush1.bf16.msra.mxu0 %v810
    %1056 = vmatprep.subr.bf16.mxu0 %v819
    %1057 = vmatpush1.bf16.msra.mxu0 %v818
    %1058 = vmatprep.subr.bf16.mxu0 %v827
    %1059 = vmatpush1.bf16.msra.mxu0 %v826
    %1060 = vmatprep.subr.bf16.mxu0 %v835
    %1061 = vmatpush1.bf16.msra.mxu0 %v834
    %1062 = vmatprep.subr.bf16.mxu0 %v843
    %1063 = vmatpush1.bf16.msra.mxu0 %v842
    %1064 = vmatprep.subr.bf16.mxu0 %v851
    %1065 = vmatpush1.bf16.msra.mxu0 %v850
    %1066 = vmatprep.subr.bf16.mxu0 %v859
    %1067 = vmatpush1.bf16.msra.mxu0 %v858
    %1068 = vmatprep.subr.bf16.mxu0 %v867
    %1069 = vmatpush1.bf16.msra.mxu0 %v866
    %1070 = vmatprep.subr.bf16.mxu0 %v875
    %1071 = vmatpush1.bf16.msra.mxu0 %v874
    %1072 = vmatprep.subr.bf16.mxu0 %v883
    %1073 = vmatpush1.bf16.msra.mxu0 %v882
    %1074 = vmatprep.subr.bf16.mxu0 %v891
    %1075 = vmatpush1.bf16.msra.mxu0 %v890
    %1076 = vmatprep.subr.bf16.mxu0 %v899
    %1077 = vmatpush1.bf16.msra.mxu0 %v898
    %1078 = vmatprep.subr.bf16.mxu0 %v907
    %1079 = vmatpush1.bf16.msra.mxu0 %v906
    %1080 = vmatprep.subr.bf16.mxu0 %v915
    %1081 = vmatpush1.bf16.msra.mxu0 %v914
    %1082 = vmatprep.mubr.bf16.mxu0 %v239
    %1083 = vmatmul.mubr.bf16.gmra.mrb[0].mxu0 %v238
    %v1084 = vpop.f32.mrb[0].mxu0
    %v1085 = vadd.f32 %v373, %v1084
    %v1086 = vpop.f32.mrb[0].mxu0
    %v1087 = vadd.f32 %v377, %v1086
    %v1088 = vpop.f32.mrb[0].mxu0
    %v1089 = vpop.f32.mrb[0].mxu0
    %1090 = vdwg.mxu0
    %1091 = vmatprep.subr.bf16.mxu0 %v797
    %1092 = vmatpush1.bf16.msra.mxu0 %v796
    %1093 = vmatprep.subr.bf16.mxu0 %v805
    %1094 = vmatpush1.bf16.msra.mxu0 %v804
    %1095 = vmatprep.subr.bf16.mxu0 %v813
    %1096 = vmatpush1.bf16.msra.mxu0 %v812
    %1097 = vmatprep.subr.bf16.mxu0 %v821
    %1098 = vmatpush1.bf16.msra.mxu0 %v820
    %1099 = vmatprep.subr.bf16.mxu0 %v829
    %1100 = vmatpush1.bf16.msra.mxu0 %v828
    %1101 = vmatprep.subr.bf16.mxu0 %v837
    %1102 = vmatpush1.bf16.msra.mxu0 %v836
    %1103 = vmatprep.subr.bf16.mxu0 %v845
    %1104 = vmatpush1.bf16.msra.mxu0 %v844
    %1105 = vmatprep.subr.bf16.mxu0 %v853
    %1106 = vmatpush1.bf16.msra.mxu0 %v852
    %1107 = vmatprep.subr.bf16.mxu0 %v861
    %1108 = vmatpush1.bf16.msra.mxu0 %v860
    %1109 = vmatprep.subr.bf16.mxu0 %v869
    %1110 = vmatpush1.bf16.msra.mxu0 %v868
    %1111 = vmatprep.subr.bf16.mxu0 %v877
    %1112 = vmatpush1.bf16.msra.mxu0 %v876
    %1113 = vmatprep.subr.bf16.mxu0 %v885
    %1114 = vmatpush1.bf16.msra.mxu0 %v884
    %1115 = vmatprep.subr.bf16.mxu0 %v893
    %1116 = vmatpush1.bf16.msra.mxu0 %v892
    %1117 = vmatprep.subr.bf16.mxu0 %v901
    %1118 = vmatpush1.bf16.msra.mxu0 %v900
    %1119 = vmatprep.subr.bf16.mxu0 %v909
    %1120 = vmatpush1.bf16.msra.mxu0 %v908
    %1121 = vmatprep.subr.bf16.mxu0 %v917
    %1122 = vmatpush1.bf16.msra.mxu0 %v916
    %1123 = vmatprep.mubr.bf16.mxu0 %v239
    %1124 = vmatmul.mubr.bf16.gmra.mrb[0].mxu0 %v238
    %v1125 = vpop.f32.mrb[0].mxu0
    %v1126 = vadd.f32 %v381, %v1125
    %v1127 = vpop.f32.mrb[0].mxu0
    %v1128 = vadd.f32 %v385, %v1127
    %v1129 = vpop.f32.mrb[0].mxu0
    %v1130 = vpop.f32.mrb[0].mxu0
    %1131 = vdwg.mxu0
    %1132 = vmatprep.subr.bf16.mxu0 %v799
    %1133 = vmatpush1.bf16.msra.mxu0 %v798
    %1134 = vmatprep.subr.bf16.mxu0 %v807
    %1135 = vmatpush1.bf16.msra.mxu0 %v806
    %1136 = vmatprep.subr.bf16.mxu0 %v815
    %1137 = vmatpush1.bf16.msra.mxu0 %v814
    %1138 = vmatprep.subr.bf16.mxu0 %v823
    %1139 = vmatpush1.bf16.msra.mxu0 %v822
    %1140 = vmatprep.subr.bf16.mxu0 %v831
    %1141 = vmatpush1.bf16.msra.mxu0 %v830
    %1142 = vmatprep.subr.bf16.mxu0 %v839
    %1143 = vmatpush1.bf16.msra.mxu0 %v838
    %1144 = vmatprep.subr.bf16.mxu0 %v847
    %1145 = vmatpush1.bf16.msra.mxu0 %v846
    %1146 = vmatprep.subr.bf16.mxu0 %v855
    %1147 = vmatpush1.bf16.msra.mxu0 %v854
    %1148 = vmatprep.subr.bf16.mxu0 %v863
    %1149 = vmatpush1.bf16.msra.mxu0 %v862
    %1150 = vmatprep.subr.bf16.mxu0 %v871
    %1151 = vmatpush1.bf16.msra.mxu0 %v870
    %1152 = vmatprep.subr.bf16.mxu0 %v879
    %1153 = vmatpush1.bf16.msra.mxu0 %v878
    %1154 = vmatprep.subr.bf16.mxu0 %v887
    %1155 = vmatpush1.bf16.msra.mxu0 %v886
    %1156 = vmatprep.subr.bf16.mxu0 %v895
    %1157 = vmatpush1.bf16.msra.mxu0 %v894
    %1158 = vmatprep.subr.bf16.mxu0 %v903
    %1159 = vmatpush1.bf16.msra.mxu0 %v902
    %1160 = vmatprep.subr.bf16.mxu0 %v911
    %1161 = vmatpush1.bf16.msra.mxu0 %v910
    %1162 = vmatprep.subr.bf16.mxu0 %v919
    %1163 = vmatpush1.bf16.msra.mxu0 %v918
    %1164 = vmatprep.mubr.bf16.mxu0 %v239
    %1165 = vmatmul.mubr.bf16.gmra.mrb[0].mxu0 %v238
    %v1166 = vpop.f32.mrb[0].mxu0
    %v1167 = vadd.f32 %v389, %v1166
    %v1168 = vpop.f32.mrb[0].mxu0
    %v1169 = vadd.f32 %v393, %v1168
    %v1170 = vpop.f32.mrb[0].mxu0
    %v1171 = vpop.f32.mrb[0].mxu0
    %1172 = vdwg.mxu0
    %1173 = vmatprep.subr.bf16.mxu0 %v801
    %1174 = vmatpush1.bf16.msra.mxu0 %v800
    %1175 = vmatprep.subr.bf16.mxu0 %v809
    %1176 = vmatpush1.bf16.msra.mxu0 %v808
    %1177 = vmatprep.subr.bf16.mxu0 %v817
    %1178 = vmatpush1.bf16.msra.mxu0 %v816
    %1179 = vmatprep.subr.bf16.mxu0 %v825
    %1180 = vmatpush1.bf16.msra.mxu0 %v824
    %1181 = vmatprep.subr.bf16.mxu0 %v833
    %1182 = vmatpush1.bf16.msra.mxu0 %v832
    %1183 = vmatprep.subr.bf16.mxu0 %v841
    %1184 = vmatpush1.bf16.msra.mxu0 %v840
    %1185 = vmatprep.subr.bf16.mxu0 %v849
    %1186 = vmatpush1.bf16.msra.mxu0 %v848
    %1187 = vmatprep.subr.bf16.mxu0 %v857
    %1188 = vmatpush1.bf16.msra.mxu0 %v856
    %1189 = vmatprep.subr.bf16.mxu0 %v865
    %1190 = vmatpush1.bf16.msra.mxu0 %v864
    %1191 = vmatprep.subr.bf16.mxu0 %v873
    %1192 = vmatpush1.bf16.msra.mxu0 %v872
    %1193 = vmatprep.subr.bf16.mxu0 %v881
    %1194 = vmatpush1.bf16.msra.mxu0 %v880
    %1195 = vmatprep.subr.bf16.mxu0 %v889
    %1196 = vmatpush1.bf16.msra.mxu0 %v888
    %1197 = vmatprep.subr.bf16.mxu0 %v897
    %1198 = vmatpush1.bf16.msra.mxu0 %v896
    %1199 = vmatprep.subr.bf16.mxu0 %v905
    %1200 = vmatpush1.bf16.msra.mxu0 %v904
    %1201 = vmatprep.subr.bf16.mxu0 %v913
    %1202 = vmatpush1.bf16.msra.mxu0 %v912
    %1203 = vmatprep.subr.bf16.mxu0 %v921
    %1204 = vmatpush1.bf16.msra.mxu0 %v920
    %1205 = vmatprep.mubr.bf16.mxu0 %v239
    %1206 = vmatmul.mubr.bf16.gmra.mrb[0].mxu0 %v238
    %v1207 = vpop.f32.mrb[0].mxu0
    %v1208 = vadd.f32 %v397, %v1207
    %v1209 = vpop.f32.mrb[0].mxu0
    %v1210 = vadd.f32 %v401, %v1209
    %v1211 = vpop.f32.mrb[0].mxu0
    %v1212 = vpop.f32.mrb[0].mxu0
    %1213 = vdwg.mxu0
    %vm1214 = vcmp.gt.f32.partialorder %v1085, 0.0
    %vm1215 = vcmp.gt.f32.partialorder %v1087, 0.0
    %vm1216 = vcmp.gt.f32.partialorder %v1126, 0.0
    %vm1217 = vcmp.gt.f32.partialorder %v1128, 0.0
    %vm1218 = vcmp.gt.f32.partialorder %v1167, 0.0
    %vm1219 = vcmp.gt.f32.partialorder %v1169, 0.0
    %vm1220 = vcmp.gt.f32.partialorder %v1208, 0.0
    %vm1221 = vcmp.gt.f32.partialorder %v1210, 0.0
    %v1222 = vmul.f32 %v1085, 0.01
    %v1223 = vmul.f32 %v1087, 0.01
    %v1224 = vmul.f32 %v1126, 0.01
    %v1225 = vmul.f32 %v1128, 0.01
    %v1226 = vmul.f32 %v1167, 0.01
    %v1227 = vmul.f32 %v1169, 0.01
    %v1228 = vmul.f32 %v1208, 0.01
    %v1229 = vmul.f32 %v1210, 0.01
    %v1230 = vsel %vm1214, %v1085, %v1222
    %v1231 = vsel %vm1215, %v1087, %v1223
    %v1232 = vsel %vm1216, %v1126, %v1224
    %v1233 = vsel %vm1217, %v1128, %v1225
    %v1234 = vsel %vm1218, %v1167, %v1226
    %v1235 = vsel %vm1219, %v1169, %v1227
    %v1236 = vsel %vm1220, %v1208, %v1228
    %v1237 = vsel %vm1221, %v1210, %v1229
    %v1238 = vpack.c.bf16 %v1230, %v1230
    %v1239 = vpack.c.bf16 %v1231, %v1231
    %v1240 = vpack.c.bf16 %v1232, %v1232
    %v1241 = vpack.c.bf16 %v1233, %v1233
    %v1242 = vpack.c.bf16 %v1234, %v1234
    %v1243 = vpack.c.bf16 %v1235, %v1235
    %v1244 = vpack.c.bf16 %v1236, %v1236
    %v1245 = vpack.c.bf16 %v1237, %v1237
    %v1246 = vld [vmem:[#allocation8] sm:$0xf]
    %v1247 = vld [vmem:[#allocation8 + $0x4] sm:$0xf]
    %v1248 = vld [vmem:[#allocation8 + $0x8] sm:$0xf]
    %v1249 = vld [vmem:[#allocation8 + $0xc] sm:$0xf]
    %v1250 = vld [vmem:[#allocation8 + $0x10] sm:$0xf]
    %v1251 = vld [vmem:[#allocation8 + $0x14] sm:$0xf]
    %v1252 = vld [vmem:[#allocation8 + $0x18] sm:$0xf]
    %v1253 = vld [vmem:[#allocation8 + $0x1c] sm:$0xf]
    %v1254 = vld [vmem:[#allocation8 + $0x20] sm:$0xf]
    %v1255 = vld [vmem:[#allocation8 + $0x24] sm:$0xf]
    %v1256 = vld [vmem:[#allocation8 + $0x28] sm:$0xf]
    %v1257 = vld [vmem:[#allocation8 + $0x2c] sm:$0xf]
    %v1258 = vld [vmem:[#allocation8 + $0x30] sm:$0xf]
    %v1259 = vld [vmem:[#allocation8 + $0x34] sm:$0xf]
    %v1260 = vld [vmem:[#allocation8 + $0x38] sm:$0xf]
    %v1261 = vld [vmem:[#allocation8 + $0x3c] sm:$0xf]
    %v1262 = vld [vmem:[#allocation8 + $0x40] sm:$0xf]
    %v1263 = vld [vmem:[#allocation8 + $0x44] sm:$0xf]
    %v1264 = vld [vmem:[#allocation8 + $0x48] sm:$0xf]
    %v1265 = vld [vmem:[#allocation8 + $0x4c] sm:$0xf]
    %v1266 = vld [vmem:[#allocation8 + $0x50] sm:$0xf]
    %v1267 = vld [vmem:[#allocation8 + $0x54] sm:$0xf]
    %v1268 = vld [vmem:[#allocation8 + $0x58] sm:$0xf]
    %v1269 = vld [vmem:[#allocation8 + $0x5c] sm:$0xf]
    %v1270 = vld [vmem:[#allocation8 + $0x60] sm:$0xf]
    %v1271 = vld [vmem:[#allocation8 + $0x64] sm:$0xf]
    %v1272 = vld [vmem:[#allocation8 + $0x68] sm:$0xf]
    %v1273 = vld [vmem:[#allocation8 + $0x6c] sm:$0xf]
    %v1274 = vld [vmem:[#allocation8 + $0x70] sm:$0xf]
    %v1275 = vld [vmem:[#allocation8 + $0x74] sm:$0xf]
    %v1276 = vld [vmem:[#allocation8 + $0x78] sm:$0xf]
    %v1277 = vld [vmem:[#allocation8 + $0x7c] sm:$0xf]
    %v1278 = vld [vmem:[#allocation8 + $0x80] sm:$0xf]
    %v1279 = vld [vmem:[#allocation8 + $0x84] sm:$0xf]
    %v1280 = vld [vmem:[#allocation8 + $0x88] sm:$0xf]
    %v1281 = vld [vmem:[#allocation8 + $0x8c] sm:$0xf]
    %v1282 = vld [vmem:[#allocation8 + $0x90] sm:$0xf]
    %v1283 = vld [vmem:[#allocation8 + $0x94] sm:$0xf]
    %v1284 = vld [vmem:[#allocation8 + $0x98] sm:$0xf]
    %v1285 = vld [vmem:[#allocation8 + $0x9c] sm:$0xf]
    %v1286 = vld [vmem:[#allocation8 + $0xa0] sm:$0xf]
    %v1287 = vld [vmem:[#allocation8 + $0xa4] sm:$0xf]
    %v1288 = vld [vmem:[#allocation8 + $0xa8] sm:$0xf]
    %v1289 = vld [vmem:[#allocation8 + $0xac] sm:$0xf]
    %v1290 = vld [vmem:[#allocation8 + $0xb0] sm:$0xf]
    %v1291 = vld [vmem:[#allocation8 + $0xb4] sm:$0xf]
    %v1292 = vld [vmem:[#allocation8 + $0xb8] sm:$0xf]
    %v1293 = vld [vmem:[#allocation8 + $0xbc] sm:$0xf]
    %v1294 = vld [vmem:[#allocation8 + $0xc0] sm:$0xf]
    %v1295 = vld [vmem:[#allocation8 + $0xc4] sm:$0xf]
    %v1296 = vld [vmem:[#allocation8 + $0xc8] sm:$0xf]
    %v1297 = vld [vmem:[#allocation8 + $0xcc] sm:$0xf]
    %v1298 = vld [vmem:[#allocation8 + $0xd0] sm:$0xf]
    %v1299 = vld [vmem:[#allocation8 + $0xd4] sm:$0xf]
    %v1300 = vld [vmem:[#allocation8 + $0xd8] sm:$0xf]
    %v1301 = vld [vmem:[#allocation8 + $0xdc] sm:$0xf]
    %v1302 = vld [vmem:[#allocation8 + $0xe0] sm:$0xf]
    %v1303 = vld [vmem:[#allocation8 + $0xe4] sm:$0xf]
    %v1304 = vld [vmem:[#allocation8 + $0xe8] sm:$0xf]
    %v1305 = vld [vmem:[#allocation8 + $0xec] sm:$0xf]
    %v1306 = vld [vmem:[#allocation8 + $0xf0] sm:$0xf]
    %v1307 = vld [vmem:[#allocation8 + $0xf4] sm:$0xf]
    %v1308 = vld [vmem:[#allocation8 + $0xf8] sm:$0xf]
    %v1309 = vld [vmem:[#allocation8 + $0xfc] sm:$0xf]
    %v1310 = vld [vmem:[#allocation8 + $0x100] sm:$0xf]
    %v1311 = vld [vmem:[#allocation8 + $0x104] sm:$0xf]
    %v1312 = vld [vmem:[#allocation8 + $0x108] sm:$0xf]
    %v1313 = vld [vmem:[#allocation8 + $0x10c] sm:$0xf]
    %v1314 = vld [vmem:[#allocation8 + $0x110] sm:$0xf]
    %v1315 = vld [vmem:[#allocation8 + $0x114] sm:$0xf]
    %v1316 = vld [vmem:[#allocation8 + $0x118] sm:$0xf]
    %v1317 = vld [vmem:[#allocation8 + $0x11c] sm:$0xf]
    %v1318 = vld [vmem:[#allocation8 + $0x120] sm:$0xf]
    %v1319 = vld [vmem:[#allocation8 + $0x124] sm:$0xf]
    %v1320 = vld [vmem:[#allocation8 + $0x128] sm:$0xf]
    %v1321 = vld [vmem:[#allocation8 + $0x12c] sm:$0xf]
    %v1322 = vld [vmem:[#allocation8 + $0x130] sm:$0xf]
    %v1323 = vld [vmem:[#allocation8 + $0x134] sm:$0xf]
    %v1324 = vld [vmem:[#allocation8 + $0x138] sm:$0xf]
    %v1325 = vld [vmem:[#allocation8 + $0x13c] sm:$0xf]
    %v1326 = vld [vmem:[#allocation8 + $0x140] sm:$0xf]
    %v1327 = vld [vmem:[#allocation8 + $0x144] sm:$0xf]
    %v1328 = vld [vmem:[#allocation8 + $0x148] sm:$0xf]
    %v1329 = vld [vmem:[#allocation8 + $0x14c] sm:$0xf]
    %v1330 = vld [vmem:[#allocation8 + $0x150] sm:$0xf]
    %v1331 = vld [vmem:[#allocation8 + $0x154] sm:$0xf]
    %v1332 = vld [vmem:[#allocation8 + $0x158] sm:$0xf]
    %v1333 = vld [vmem:[#allocation8 + $0x15c] sm:$0xf]
    %v1334 = vld [vmem:[#allocation8 + $0x160] sm:$0xf]
    %v1335 = vld [vmem:[#allocation8 + $0x164] sm:$0xf]
    %v1336 = vld [vmem:[#allocation8 + $0x168] sm:$0xf]
    %v1337 = vld [vmem:[#allocation8 + $0x16c] sm:$0xf]
    %v1338 = vld [vmem:[#allocation8 + $0x170] sm:$0xf]
    %v1339 = vld [vmem:[#allocation8 + $0x174] sm:$0xf]
    %v1340 = vld [vmem:[#allocation8 + $0x178] sm:$0xf]
    %v1341 = vld [vmem:[#allocation8 + $0x17c] sm:$0xf]
    %v1342 = vld [vmem:[#allocation8 + $0x180] sm:$0xf]
    %v1343 = vld [vmem:[#allocation8 + $0x184] sm:$0xf]
    %v1344 = vld [vmem:[#allocation8 + $0x188] sm:$0xf]
    %v1345 = vld [vmem:[#allocation8 + $0x18c] sm:$0xf]
    %v1346 = vld [vmem:[#allocation8 + $0x190] sm:$0xf]
    %v1347 = vld [vmem:[#allocation8 + $0x194] sm:$0xf]
    %v1348 = vld [vmem:[#allocation8 + $0x198] sm:$0xf]
    %v1349 = vld [vmem:[#allocation8 + $0x19c] sm:$0xf]
    %v1350 = vld [vmem:[#allocation8 + $0x1a0] sm:$0xf]
    %v1351 = vld [vmem:[#allocation8 + $0x1a4] sm:$0xf]
    %v1352 = vld [vmem:[#allocation8 + $0x1a8] sm:$0xf]
    %v1353 = vld [vmem:[#allocation8 + $0x1ac] sm:$0xf]
    %v1354 = vld [vmem:[#allocation8 + $0x1b0] sm:$0xf]
    %v1355 = vld [vmem:[#allocation8 + $0x1b4] sm:$0xf]
    %v1356 = vld [vmem:[#allocation8 + $0x1b8] sm:$0xf]
    %v1357 = vld [vmem:[#allocation8 + $0x1bc] sm:$0xf]
    %v1358 = vld [vmem:[#allocation8 + $0x1c0] sm:$0xf]
    %v1359 = vld [vmem:[#allocation8 + $0x1c4] sm:$0xf]
    %v1360 = vld [vmem:[#allocation8 + $0x1c8] sm:$0xf]
    %v1361 = vld [vmem:[#allocation8 + $0x1cc] sm:$0xf]
    %v1362 = vld [vmem:[#allocation8 + $0x1d0] sm:$0xf]
    %v1363 = vld [vmem:[#allocation8 + $0x1d4] sm:$0xf]
    %v1364 = vld [vmem:[#allocation8 + $0x1d8] sm:$0xf]
    %v1365 = vld [vmem:[#allocation8 + $0x1dc] sm:$0xf]
    %v1366 = vld [vmem:[#allocation8 + $0x1e0] sm:$0xf]
    %v1367 = vld [vmem:[#allocation8 + $0x1e4] sm:$0xf]
    %v1368 = vld [vmem:[#allocation8 + $0x1e8] sm:$0xf]
    %v1369 = vld [vmem:[#allocation8 + $0x1ec] sm:$0xf]
    %v1370 = vld [vmem:[#allocation8 + $0x1f0] sm:$0xf]
    %v1371 = vld [vmem:[#allocation8 + $0x1f4] sm:$0xf]
    %v1372 = vld [vmem:[#allocation8 + $0x1f8] sm:$0xf]
    %v1373 = vld [vmem:[#allocation8 + $0x1fc] sm:$0xf]
    %v1374 = vld [vmem:[%s6] sm:$0x1]
    %v1376 = vlaneseq
    %v1377 = vshrl.u32 %v1376, 7
    %v1378 = vsub.s32 0, %v1377
    %v1379 = vrot.slane %v1374, %v1378
    %v1509 = vunpack.c.l.b16 %v1246
    %v1510 = vunpack.c.l.b16 %v1247
    %v1511 = vunpack.c.l.b16 %v1248
    %v1512 = vunpack.c.l.b16 %v1249
    %v1513 = vunpack.c.l.b16 %v1250
    %v1514 = vunpack.c.l.b16 %v1251
    %v1515 = vunpack.c.l.b16 %v1252
    %v1516 = vunpack.c.l.b16 %v1253
    %v1517 = vunpack.c.l.b16 %v1254
    %v1518 = vunpack.c.l.b16 %v1255
    %v1519 = vunpack.c.l.b16 %v1256
    %v1520 = vunpack.c.l.b16 %v1257
    %v1521 = vunpack.c.l.b16 %v1258
    %v1522 = vunpack.c.l.b16 %v1259
    %v1523 = vunpack.c.l.b16 %v1260
    %v1524 = vunpack.c.l.b16 %v1261
    %v1525 = vunpack.c.l.b16 %v1262
    %v1526 = vunpack.c.l.b16 %v1263
    %v1527 = vunpack.c.l.b16 %v1264
    %v1528 = vunpack.c.l.b16 %v1265
    %v1529 = vunpack.c.l.b16 %v1266
    %v1530 = vunpack.c.l.b16 %v1267
    %v1531 = vunpack.c.l.b16 %v1268
    %v1532 = vunpack.c.l.b16 %v1269
    %v1533 = vunpack.c.l.b16 %v1270
    %v1534 = vunpack.c.l.b16 %v1271
    %v1535 = vunpack.c.l.b16 %v1272
    %v1536 = vunpack.c.l.b16 %v1273
    %v1537 = vunpack.c.l.b16 %v1274
    %v1538 = vunpack.c.l.b16 %v1275
    %v1539 = vunpack.c.l.b16 %v1276
    %v1540 = vunpack.c.l.b16 %v1277
    %v1541 = vunpack.c.l.b16 %v1278
    %v1542 = vunpack.c.l.b16 %v1279
    %v1543 = vunpack.c.l.b16 %v1280
    %v1544 = vunpack.c.l.b16 %v1281
    %v1545 = vunpack.c.l.b16 %v1282
    %v1546 = vunpack.c.l.b16 %v1283
    %v1547 = vunpack.c.l.b16 %v1284
    %v1548 = vunpack.c.l.b16 %v1285
    %v1549 = vunpack.c.l.b16 %v1286
    %v1550 = vunpack.c.l.b16 %v1287
    %v1551 = vunpack.c.l.b16 %v1288
    %v1552 = vunpack.c.l.b16 %v1289
    %v1553 = vunpack.c.l.b16 %v1290
    %v1554 = vunpack.c.l.b16 %v1291
    %v1555 = vunpack.c.l.b16 %v1292
    %v1556 = vunpack.c.l.b16 %v1293
    %v1557 = vunpack.c.l.b16 %v1294
    %v1558 = vunpack.c.l.b16 %v1295
    %v1559 = vunpack.c.l.b16 %v1296
    %v1560 = vunpack.c.l.b16 %v1297
    %v1561 = vunpack.c.l.b16 %v1298
    %v1562 = vunpack.c.l.b16 %v1299
    %v1563 = vunpack.c.l.b16 %v1300
    %v1564 = vunpack.c.l.b16 %v1301
    %v1565 = vunpack.c.l.b16 %v1302
    %v1566 = vunpack.c.l.b16 %v1303
    %v1567 = vunpack.c.l.b16 %v1304
    %v1568 = vunpack.c.l.b16 %v1305
    %v1569 = vunpack.c.l.b16 %v1306
    %v1570 = vunpack.c.l.b16 %v1307
    %v1571 = vunpack.c.l.b16 %v1308
    %v1572 = vunpack.c.l.b16 %v1309
    %v1573 = vunpack.c.l.b16 %v1310
    %v1574 = vunpack.c.l.b16 %v1311
    %v1575 = vunpack.c.l.b16 %v1312
    %v1576 = vunpack.c.l.b16 %v1313
    %v1577 = vunpack.c.l.b16 %v1314
    %v1578 = vunpack.c.l.b16 %v1315
    %v1579 = vunpack.c.l.b16 %v1316
    %v1580 = vunpack.c.l.b16 %v1317
    %v1581 = vunpack.c.l.b16 %v1318
    %v1582 = vunpack.c.l.b16 %v1319
    %v1583 = vunpack.c.l.b16 %v1320
    %v1584 = vunpack.c.l.b16 %v1321
    %v1585 = vunpack.c.l.b16 %v1322
    %v1586 = vunpack.c.l.b16 %v1323
    %v1587 = vunpack.c.l.b16 %v1324
    %v1588 = vunpack.c.l.b16 %v1325
    %v1589 = vunpack.c.l.b16 %v1326
    %v1590 = vunpack.c.l.b16 %v1327
    %v1591 = vunpack.c.l.b16 %v1328
    %v1592 = vunpack.c.l.b16 %v1329
    %v1593 = vunpack.c.l.b16 %v1330
    %v1594 = vunpack.c.l.b16 %v1331
    %v1595 = vunpack.c.l.b16 %v1332
    %v1596 = vunpack.c.l.b16 %v1333
    %v1597 = vunpack.c.l.b16 %v1334
    %v1598 = vunpack.c.l.b16 %v1335
    %v1599 = vunpack.c.l.b16 %v1336
    %v1600 = vunpack.c.l.b16 %v1337
    %v1601 = vunpack.c.l.b16 %v1338
    %v1602 = vunpack.c.l.b16 %v1339
    %v1603 = vunpack.c.l.b16 %v1340
    %v1604 = vunpack.c.l.b16 %v1341
    %v1605 = vunpack.c.l.b16 %v1342
    %v1606 = vunpack.c.l.b16 %v1343
    %v1607 = vunpack.c.l.b16 %v1344
    %v1608 = vunpack.c.l.b16 %v1345
    %v1609 = vunpack.c.l.b16 %v1346
    %v1610 = vunpack.c.l.b16 %v1347
    %v1611 = vunpack.c.l.b16 %v1348
    %v1612 = vunpack.c.l.b16 %v1349
    %v1613 = vunpack.c.l.b16 %v1350
    %v1614 = vunpack.c.l.b16 %v1351
    %v1615 = vunpack.c.l.b16 %v1352
    %v1616 = vunpack.c.l.b16 %v1353
    %v1617 = vunpack.c.l.b16 %v1354
    %v1618 = vunpack.c.l.b16 %v1355
    %v1619 = vunpack.c.l.b16 %v1356
    %v1620 = vunpack.c.l.b16 %v1357
    %v1621 = vunpack.c.l.b16 %v1358
    %v1622 = vunpack.c.l.b16 %v1359
    %v1623 = vunpack.c.l.b16 %v1360
    %v1624 = vunpack.c.l.b16 %v1361
    %v1625 = vunpack.c.l.b16 %v1362
    %v1626 = vunpack.c.l.b16 %v1363
    %v1627 = vunpack.c.l.b16 %v1364
    %v1628 = vunpack.c.l.b16 %v1365
    %v1629 = vunpack.c.l.b16 %v1366
    %v1630 = vunpack.c.l.b16 %v1367
    %v1631 = vunpack.c.l.b16 %v1368
    %v1632 = vunpack.c.l.b16 %v1369
    %v1633 = vunpack.c.l.b16 %v1370
    %v1634 = vunpack.c.l.b16 %v1371
    %v1635 = vunpack.c.l.b16 %v1372
    %v1636 = vunpack.c.l.b16 %v1373
    %v1637 = vpack.c.b16 %v1510, %v1509
    %v1638 = vpack.c.b16 %v1512, %v1511
    %v1639 = vpack.c.b16 %v1514, %v1513
    %v1640 = vpack.c.b16 %v1516, %v1515
    %v1641 = vpack.c.b16 %v1518, %v1517
    %v1642 = vpack.c.b16 %v1520, %v1519
    %v1643 = vpack.c.b16 %v1522, %v1521
    %v1644 = vpack.c.b16 %v1524, %v1523
    %v1645 = vpack.c.b16 %v1526, %v1525
    %v1646 = vpack.c.b16 %v1528, %v1527
    %v1647 = vpack.c.b16 %v1530, %v1529
    %v1648 = vpack.c.b16 %v1532, %v1531
    %v1649 = vpack.c.b16 %v1534, %v1533
    %v1650 = vpack.c.b16 %v1536, %v1535
    %v1651 = vpack.c.b16 %v1538, %v1537
    %v1652 = vpack.c.b16 %v1540, %v1539
    %v1653 = vpack.c.b16 %v1542, %v1541
    %v1654 = vpack.c.b16 %v1544, %v1543
    %v1655 = vpack.c.b16 %v1546, %v1545
    %v1656 = vpack.c.b16 %v1548, %v1547
    %v1657 = vpack.c.b16 %v1550, %v1549
    %v1658 = vpack.c.b16 %v1552, %v1551
    %v1659 = vpack.c.b16 %v1554, %v1553
    %v1660 = vpack.c.b16 %v1556, %v1555
    %v1661 = vpack.c.b16 %v1558, %v1557
    %v1662 = vpack.c.b16 %v1560, %v1559
    %v1663 = vpack.c.b16 %v1562, %v1561
    %v1664 = vpack.c.b16 %v1564, %v1563
    %v1665 = vpack.c.b16 %v1566, %v1565
    %v1666 = vpack.c.b16 %v1568, %v1567
    %v1667 = vpack.c.b16 %v1570, %v1569
    %v1668 = vpack.c.b16 %v1572, %v1571
    %v1669 = vpack.c.b16 %v1574, %v1573
    %v1670 = vpack.c.b16 %v1576, %v1575
    %v1671 = vpack.c.b16 %v1578, %v1577
    %v1672 = vpack.c.b16 %v1580, %v1579
    %v1673 = vpack.c.b16 %v1582, %v1581
    %v1674 = vpack.c.b16 %v1584, %v1583
    %v1675 = vpack.c.b16 %v1586, %v1585
    %v1676 = vpack.c.b16 %v1588, %v1587
    %v1677 = vpack.c.b16 %v1590, %v1589
    %v1678 = vpack.c.b16 %v1592, %v1591
    %v1679 = vpack.c.b16 %v1594, %v1593
    %v1680 = vpack.c.b16 %v1596, %v1595
    %v1681 = vpack.c.b16 %v1598, %v1597
    %v1682 = vpack.c.b16 %v1600, %v1599
    %v1683 = vpack.c.b16 %v1602, %v1601
    %v1684 = vpack.c.b16 %v1604, %v1603
    %v1685 = vpack.c.b16 %v1606, %v1605
    %v1686 = vpack.c.b16 %v1608, %v1607
    %v1687 = vpack.c.b16 %v1610, %v1609
    %v1688 = vpack.c.b16 %v1612, %v1611
    %v1689 = vpack.c.b16 %v1614, %v1613
    %v1690 = vpack.c.b16 %v1616, %v1615
    %v1691 = vpack.c.b16 %v1618, %v1617
    %v1692 = vpack.c.b16 %v1620, %v1619
    %v1693 = vpack.c.b16 %v1622, %v1621
    %v1694 = vpack.c.b16 %v1624, %v1623
    %v1695 = vpack.c.b16 %v1626, %v1625
    %v1696 = vpack.c.b16 %v1628, %v1627
    %v1697 = vpack.c.b16 %v1630, %v1629
    %v1698 = vpack.c.b16 %v1632, %v1631
    %v1699 = vpack.c.b16 %v1634, %v1633
    %v1700 = vpack.c.b16 %v1636, %v1635
    %1765 = vmatprep.subr.bf16.mxu0 0
    %1766 = vmatpush1.bf16.msra.mxu0 %v1637
    %1767 = vmatprep.subr.bf16.mxu0 0
    %1768 = vmatpush1.bf16.msra.mxu0 %v1638
    %1769 = vmatprep.subr.bf16.mxu0 0
    %1770 = vmatpush1.bf16.msra.mxu0 %v1639
    %1771 = vmatprep.subr.bf16.mxu0 0
    %1772 = vmatpush1.bf16.msra.mxu0 %v1640
    %1773 = vmatprep.subr.bf16.mxu0 0
    %1774 = vmatpush1.bf16.msra.mxu0 %v1641
    %1775 = vmatprep.subr.bf16.mxu0 0
    %1776 = vmatpush1.bf16.msra.mxu0 %v1642
    %1777 = vmatprep.subr.bf16.mxu0 0
    %1778 = vmatpush1.bf16.msra.mxu0 %v1643
    %1779 = vmatprep.subr.bf16.mxu0 0
    %1780 = vmatpush1.bf16.msra.mxu0 %v1644
    %1781 = vmatprep.subr.bf16.mxu0 0
    %1782 = vmatpush1.bf16.msra.mxu0 %v1645
    %1783 = vmatprep.subr.bf16.mxu0 0
    %1784 = vmatpush1.bf16.msra.mxu0 %v1646
    %1785 = vmatprep.subr.bf16.mxu0 0
    %1786 = vmatpush1.bf16.msra.mxu0 %v1647
    %1787 = vmatprep.subr.bf16.mxu0 0
    %1788 = vmatpush1.bf16.msra.mxu0 %v1648
    %1789 = vmatprep.subr.bf16.mxu0 0
    %1790 = vmatpush1.bf16.msra.mxu0 %v1649
    %1791 = vmatprep.subr.bf16.mxu0 0
    %1792 = vmatpush1.bf16.msra.mxu0 %v1650
    %1793 = vmatprep.subr.bf16.mxu0 0
    %1794 = vmatpush1.bf16.msra.mxu0 %v1651
    %1795 = vmatprep.subr.bf16.mxu0 0
    %1796 = vmatpush1.bf16.msra.mxu0 %v1652
    %1797 = vmatprep.mubr.bf16.mxu0 %v1239
    %1798 = vmatmul.mubr.bf16.gmra.mrb[0].mxu0 %v1238
    %v1799 = vpop.f32.mrb[0].mxu0
    %v1800 = vadd.f32 %v1379, %v1799
    %v1801 = vpop.f32.mrb[0].mxu0
    %v1802 = vpop.f32.mrb[0].mxu0
    %v1803 = vpop.f32.mrb[0].mxu0
    %1804 = vdwg.mxu0
    %1805 = vmatprep.subr.bf16.mxu0 0
    %1806 = vmatpush1.bf16.msra.mxu0 %v1653
    %1807 = vmatprep.subr.bf16.mxu0 0
    %1808 = vmatpush1.bf16.msra.mxu0 %v1654
    %1809 = vmatprep.subr.bf16.mxu0 0
    %1810 = vmatpush1.bf16.msra.mxu0 %v1655
    %1811 = vmatprep.subr.bf16.mxu0 0
    %1812 = vmatpush1.bf16.msra.mxu0 %v1656
    %1813 = vmatprep.subr.bf16.mxu0 0
    %1814 = vmatpush1.bf16.msra.mxu0 %v1657
    %1815 = vmatprep.subr.bf16.mxu0 0
    %1816 = vmatpush1.bf16.msra.mxu0 %v1658
    %1817 = vmatprep.subr.bf16.mxu0 0
    %1818 = vmatpush1.bf16.msra.mxu0 %v1659
    %1819 = vmatprep.subr.bf16.mxu0 0
    %1820 = vmatpush1.bf16.msra.mxu0 %v1660
    %1821 = vmatprep.subr.bf16.mxu0 0
    %1822 = vmatpush1.bf16.msra.mxu0 %v1661
    %1823 = vmatprep.subr.bf16.mxu0 0
    %1824 = vmatpush1.bf16.msra.mxu0 %v1662
    %1825 = vmatprep.subr.bf16.mxu0 0
    %1826 = vmatpush1.bf16.msra.mxu0 %v1663
    %1827 = vmatprep.subr.bf16.mxu0 0
    %1828 = vmatpush1.bf16.msra.mxu0 %v1664
    %1829 = vmatprep.subr.bf16.mxu0 0
    %1830 = vmatpush1.bf16.msra.mxu0 %v1665
    %1831 = vmatprep.subr.bf16.mxu0 0
    %1832 = vmatpush1.bf16.msra.mxu0 %v1666
    %1833 = vmatprep.subr.bf16.mxu0 0
    %1834 = vmatpush1.bf16.msra.mxu0 %v1667
    %1835 = vmatprep.subr.bf16.mxu0 0
    %1836 = vmatpush1.bf16.msra.mxu0 %v1668
    %1837 = vmatprep.mubr.bf16.mxu0 %v1241
    %1838 = vmatmul.mubr.bf16.gmra.mrb[0].mxu0 %v1240
    %v1839 = vpop.f32.mrb[0].mxu0
    %v1840 = vadd.f32 %v1800, %v1839
    %v1841 = vpop.f32.mrb[0].mxu0
    %v1842 = vpop.f32.mrb[0].mxu0
    %v1843 = vpop.f32.mrb[0].mxu0
    %1844 = vdwg.mxu0
    %1845 = vmatprep.subr.bf16.mxu0 0
    %1846 = vmatpush1.bf16.msra.mxu0 %v1669
    %1847 = vmatprep.subr.bf16.mxu0 0
    %1848 = vmatpush1.bf16.msra.mxu0 %v1670
    %1849 = vmatprep.subr.bf16.mxu0 0
    %1850 = vmatpush1.bf16.msra.mxu0 %v1671
    %1851 = vmatprep.subr.bf16.mxu0 0
    %1852 = vmatpush1.bf16.msra.mxu0 %v1672
    %1853 = vmatprep.subr.bf16.mxu0 0
    %1854 = vmatpush1.bf16.msra.mxu0 %v1673
    %1855 = vmatprep.subr.bf16.mxu0 0
    %1856 = vmatpush1.bf16.msra.mxu0 %v1674
    %1857 = vmatprep.subr.bf16.mxu0 0
    %1858 = vmatpush1.bf16.msra.mxu0 %v1675
    %1859 = vmatprep.subr.bf16.mxu0 0
    %1860 = vmatpush1.bf16.msra.mxu0 %v1676
    %1861 = vmatprep.subr.bf16.mxu0 0
    %1862 = vmatpush1.bf16.msra.mxu0 %v1677
    %1863 = vmatprep.subr.bf16.mxu0 0
    %1864 = vmatpush1.bf16.msra.mxu0 %v1678
    %1865 = vmatprep.subr.bf16.mxu0 0
    %1866 = vmatpush1.bf16.msra.mxu0 %v1679
    %1867 = vmatprep.subr.bf16.mxu0 0
    %1868 = vmatpush1.bf16.msra.mxu0 %v1680
    %1869 = vmatprep.subr.bf16.mxu0 0
    %1870 = vmatpush1.bf16.msra.mxu0 %v1681
    %1871 = vmatprep.subr.bf16.mxu0 0
    %1872 = vmatpush1.bf16.msra.mxu0 %v1682
    %1873 = vmatprep.subr.bf16.mxu0 0
    %1874 = vmatpush1.bf16.msra.mxu0 %v1683
    %1875 = vmatprep.subr.bf16.mxu0 0
    %1876 = vmatpush1.bf16.msra.mxu0 %v1684
    %1877 = vmatprep.mubr.bf16.mxu0 %v1243
    %1878 = vmatmul.mubr.bf16.gmra.mrb[0].mxu0 %v1242
    %v1879 = vpop.f32.mrb[0].mxu0
    %v1880 = vadd.f32 %v1840, %v1879
    %v1881 = vpop.f32.mrb[0].mxu0
    %v1882 = vpop.f32.mrb[0].mxu0
    %v1883 = vpop.f32.mrb[0].mxu0
    %1884 = vdwg.mxu0
    %1885 = vmatprep.subr.bf16.mxu0 0
    %1886 = vmatpush1.bf16.msra.mxu0 %v1685
    %1887 = vmatprep.subr.bf16.mxu0 0
    %1888 = vmatpush1.bf16.msra.mxu0 %v1686
    %1889 = vmatprep.subr.bf16.mxu0 0
    %1890 = vmatpush1.bf16.msra.mxu0 %v1687
    %1891 = vmatprep.subr.bf16.mxu0 0
    %1892 = vmatpush1.bf16.msra.mxu0 %v1688
    %1893 = vmatprep.subr.bf16.mxu0 0
    %1894 = vmatpush1.bf16.msra.mxu0 %v1689
    %1895 = vmatprep.subr.bf16.mxu0 0
    %1896 = vmatpush1.bf16.msra.mxu0 %v1690
    %1897 = vmatprep.subr.bf16.mxu0 0
    %1898 = vmatpush1.bf16.msra.mxu0 %v1691
    %1899 = vmatprep.subr.bf16.mxu0 0
    %1900 = vmatpush1.bf16.msra.mxu0 %v1692
    %1901 = vmatprep.subr.bf16.mxu0 0
    %1902 = vmatpush1.bf16.msra.mxu0 %v1693
    %1903 = vmatprep.subr.bf16.mxu0 0
    %1904 = vmatpush1.bf16.msra.mxu0 %v1694
    %1905 = vmatprep.subr.bf16.mxu0 0
    %1906 = vmatpush1.bf16.msra.mxu0 %v1695
    %1907 = vmatprep.subr.bf16.mxu0 0
    %1908 = vmatpush1.bf16.msra.mxu0 %v1696
    %1909 = vmatprep.subr.bf16.mxu0 0
    %1910 = vmatpush1.bf16.msra.mxu0 %v1697
    %1911 = vmatprep.subr.bf16.mxu0 0
    %1912 = vmatpush1.bf16.msra.mxu0 %v1698
    %1913 = vmatprep.subr.bf16.mxu0 0
    %1914 = vmatpush1.bf16.msra.mxu0 %v1699
    %1915 = vmatprep.subr.bf16.mxu0 0
    %1916 = vmatpush1.bf16.msra.mxu0 %v1700
    %1917 = vmatprep.mubr.bf16.mxu0 %v1245
    %1918 = vmatmul.mubr.bf16.gmra.mrb[0].mxu0 %v1244
    %v1919 = vpop.f32.mrb[0].mxu0
    %v1920 = vadd.f32 %v1880, %v1919
    %v1921 = vpop.f32.mrb[0].mxu0
    %v1922 = vpop.f32.mrb[0].mxu0
    %v1923 = vpop.f32.mrb[0].mxu0
    %1924 = vdwg.mxu0
    %1925 = vst [vmem:[#allocation10] sm:$0xff] %v1920
    // Predicated region
    $region46: #{tpu_custom_call.1} parent=1 // pred_check
      _
    $region47: #{tpu_custom_call.1} parent=1 // pred_check_branch
      %1927 = sbr.rel (0) target = $region49
    $region48: #{tpu_custom_call.1} parent=1 // pred_region
      %s1929 = ssub.s32 128, 128
      %1930 = vsyncadd [#allocation4], %s1929
      %s1932 = sshll.u32 [#allocation10], 4
      %s1933 = int_to_ptr.vmem [resolvable:$true] %s1932
      %1935 = dma.vmem_to_hbm [thread:$0]  %s1933, 128, %s7, [#allocation4]
    $region49: #{tpu_custom_call.1} parent=1 // pred_fallthru
      _
    // Predicated region
    $region50: #{tpu_custom_call.1} parent=1 // pred_check
      _
    $region51: #{tpu_custom_call.1} parent=1 // pred_check_branch
      %1937 = sbr.rel (0) target = $region53
    $region52: #{tpu_custom_call.1} parent=1 // pred_region
      %1938 = dma.done [#allocation4], 128
    $region53: #{tpu_custom_call.1} parent=1 // pred_fallthru
      _
    %1939 = vsyncpa [#allocation3], 1
    %1940 = vsyncpa [#allocation6], 1
    %1941 = vsyncpa [#allocation9], 1
    %1942 = vsyncpa [#allocation4], 1

</llo_original>
